<compile_context>
chip_gen: v7x
topology: tpu7x:2x2x1
jax: 0.10.0
libtpu: 0.0.40
codegen_flags: <defaults>
</compile_context>

<pallas_src>
import functools
import math

import jax
import jax.numpy as jnp
from jax.experimental import pallas as pl
from jax.experimental.pallas import tpu as pltpu


def _round_up(x, m):
    return ((x + m - 1) // m) * m


def _agcrn_cell_kernel(inp_ref, st_ref, sbd_ref, wg_ref, wux_ref, wus_ref,
                       et_ref, bg_ref, bu_ref, h_ref,
                       *, cheb_k, dim_out, embed_dim):
    f32 = jnp.float32
    cog = 2 * dim_out
    cou = dim_out

    inp = inp_ref[...]          # (rows, cin2)     rows ordered (b, n); [x | state]
    st = st_ref[...]            # (rows, dim_out)
    et = et_ref[...]            # (rows, embed_dim)

    # ---- gate AVWGCN -------------------------------------------------------
    # Mg[r, d*cog + o] = sum_{k,i} (S_k inp)[r, i] * Wg[k, i, d*cog + o]
    # k = 0 support is the identity and is applied implicitly (no eye matmul).
    mg = jnp.dot(inp, wg_ref[0], preferred_element_type=f32)
    si_cache = []
    for k in range(1, cheb_k):
        si = jnp.dot(sbd_ref[k - 1], inp, preferred_element_type=f32)   # block-diag S_k
        si_cache.append(si)
        mg = mg + jnp.dot(si, wg_ref[k], preferred_element_type=f32)

    # Fold over embed_dim on the VPU (replaces the 1/embed_dim-dense identity matmul):
    #   zr_pre[r, o] = bias[r, o] + sum_d E[r, d] * Mg[r, d*cog + o]
    zr_acc = bg_ref[...]
    for d in range(embed_dim):
        zr_acc = zr_acc + mg[:, d * cog:(d + 1) * cog] * et[:, d:d + 1]
    zr = jax.nn.sigmoid(zr_acc)                # (rows, 2*dim_out)
    z = zr[:, :dim_out]
    r = zr[:, dim_out:]

    # ---- update AVWGCN -----------------------------------------------------
    # Input is [x | z*state].  The x part re-uses the cached S_k·[x|state]
    # products through a weight slab whose state-input rows are zeroed, so no
    # lane-unaligned slicing / concatenation is needed.
    cs = z * st
    mu = (jnp.dot(inp, wux_ref[0], preferred_element_type=f32) +
          jnp.dot(cs, wus_ref[0], preferred_element_type=f32))
    for k in range(1, cheb_k):
        sc = jnp.dot(sbd_ref[k - 1], cs, preferred_element_type=f32)
        mu = (mu + jnp.dot(si_cache[k - 1], wux_ref[k], preferred_element_type=f32)
                 + jnp.dot(sc, wus_ref[k], preferred_element_type=f32))

    hc_acc = bu_ref[...]
    for d in range(embed_dim):
        hc_acc = hc_acc + mu[:, d * cou:(d + 1) * cou] * et[:, d:d + 1]
    hc = jnp.tanh(hc_acc)                       # (rows, dim_out)

    h_ref[...] = r * st + (1.0 - r) * hc


def agcrn_cell_forward(x, state, node_embeddings, params, block_b=None,
                       target_rows=512):
    """Pallas implementation of AGCRNCell.forward."""
    B, N, dim_in = x.shape
    dim_out = state.shape[-1]
    D = node_embeddings.shape[-1]
    wp_g, bp_g, wp_u, bp_u = params
    cheb_k = wp_g.shape[1]
    assert cheb_k >= 2, "AGCRNCell/AVWGCN requires cheb_k >= 2"

    f32 = jnp.float32
    cin2 = dim_in + dim_out
    cog = 2 * dim_out
    cou = dim_out

    E = node_embeddings.astype(f32)

    # ---- batch-invariant precompute (runs ONCE, outside the grid loop) ------
    # NOTE: when this cell sits inside a time-step scan, hoist this block out of
    # the scan at the caller level (it is constant across timesteps).
    s1 = jax.nn.softmax(jnp.maximum(E @ E.T, 0.0), axis=1)
    supports = [s1]
    prev_prev, prev = jnp.eye(N, dtype=f32), s1
    for _ in range(2, cheb_k):
        nxt = 2.0 * (s1 @ prev) - prev_prev
        supports.append(nxt)
        prev_prev, prev = prev, nxt
    s_stack = jnp.stack(supports, axis=0)                  # (cheb_k-1, N, N)

    # ---- blocking / padding --------------------------------------------------
    N_pad = _round_up(N, 8)                                # sublane alignment
    if block_b is None:
        block_b = max(1, min(B, target_rows // N_pad))
        if B >= 2:
            # keep >= 2 grid blocks so "parallel" can shard across v7x's 2 TCs
            block_b = min(block_b, -(-B // 2))
    B_pad = _round_up(B, block_b)
    num_blocks = B_pad // block_b
    rows = block_b * N_pad                                 # rows % 8 == 0

    # zero-padded node embeddings / supports (padded rows+cols contribute zero)
    E_p = jnp.zeros((N_pad, D), f32).at[:N, :].set(E)
    S_p = jnp.zeros((cheb_k - 1, N_pad, N_pad), f32).at[:, :N, :N].set(s_stack)
    # block-diagonal support stack over the batch block: (cheb_k-1, rows, rows)
    sbd = (jnp.einsum('knm,bc->kbncm', S_p, jnp.eye(block_b, dtype=f32))
              .reshape(cheb_k - 1, rows, rows))

    x_p = jnp.zeros((B_pad, N_pad, dim_in), f32).at[:B, :N, :].set(x.astype(f32))
    st_p = jnp.zeros((B_pad, N_pad, dim_out), f32).at[:B, :N, :].set(state.astype(f32))
    inp = jnp.concatenate([x_p, st_p], axis=-1).reshape(B_pad * N_pad, cin2)
    st2 = st_p.reshape(B_pad * N_pad, dim_out)

    # weight slabs: (cheb_k, in, D*out) with the embed_dim axis folded into lanes
    wg = jnp.transpose(wp_g.astype(f32), (1, 2, 0, 3)).reshape(cheb_k, cin2, D * cog)
    wu_full = jnp.transpose(wp_u.astype(f32), (1, 2, 0, 3))        # (K, cin2, D, cou)
    wux = wu_full.at[:, dim_in:, :, :].set(0.0).reshape(cheb_k, cin2, D * cou)
    wus = wu_full[:, dim_in:, :, :].reshape(cheb_k, dim_out, D * cou)

    et = jnp.tile(E_p, (block_b, 1))                               # (rows, D)
    bg = jnp.tile(E_p @ bp_g.astype(f32), (block_b, 1))            # (rows, 2*dim_out)
    bu = jnp.tile(E_p @ bp_u.astype(f32), (block_b, 1))            # (rows, dim_out)

    operands = (inp, st2, sbd, wg, wux, wus, et, bg, bu)

    def _const_spec(a):
        zeros = (0,) * a.ndim
        return pl.BlockSpec(a.shape, lambda g, _z=zeros: _z)

    in_specs = [
        pl.BlockSpec((rows, cin2), lambda g: (g, 0)),
        pl.BlockSpec((rows, dim_out), lambda g: (g, 0)),
    ] + [_const_spec(a) for a in operands[2:]]
    out_specs = pl.BlockSpec((rows, dim_out), lambda g: (g, 0))

    # ---- VMEM budget: constants (double-buffered) + per-block I/O + intermediates
    const_elems = sum(int(math.prod(a.shape)) for a in operands[2:])
    block_io_elems = rows * (cin2 + 2 * dim_out)
    interm_elems = rows * (D * cog + D * cou                  # mg, mu
                           + (cheb_k - 1) * cin2              # S_k·inp cache
                           + 6 * cog)                          # zr / cs / tail temps
    vmem_need = 4 * (2 * const_elems + 2 * block_io_elems + interm_elems) + (4 << 20)
    vmem_limit = int(min(max(vmem_need, 16 << 20), 48 << 20))

    kernel = functools.partial(_agcrn_cell_kernel, cheb_k=cheb_k,
                               dim_out=dim_out, embed_dim=D)

    h_flat = pl.pallas_call(
        kernel,
        out_shape=jax.ShapeDtypeStruct((B_pad * N_pad, dim_out), f32),
        grid_spec=pltpu.PrefetchScalarGridSpec(
            num_scalar_prefetch=0,
            grid=(num_blocks,),
            in_specs=in_specs,
            out_specs=out_specs,
        ),
        compiler_params=pltpu.CompilerParams(
            dimension_semantics=("parallel",),
            vmem_limit_bytes=vmem_limit),
    )(*operands)

    return h_flat.reshape(B_pad, N_pad, dim_out)[:B, :N, :]


def agcrn_cell_reference(x, state, node_embeddings, params):
    """Pure-JAX mirror of the PyTorch module (for correctness checking)."""
    wp_g, bp_g, wp_u, bp_u = params
    cheb_k = wp_g.shape[1]
    N = node_embeddings.shape[0]
    dim_out = state.shape[-1]

    def avwgcn(inp, wp, bp):
        supports = jax.nn.softmax(
            jnp.maximum(node_embeddings @ node_embeddings.T, 0.0), axis=1)
        ss = [jnp.eye(N, dtype=jnp.float32), supports]
        for _ in range(2, cheb_k):
            ss.append(2.0 * supports @ ss[-1] - ss[-2])
        S = jnp.stack(ss, axis=0)
        weights = jnp.einsum('nd,dkio->nkio', node_embeddings, wp)
        bias = node_embeddings @ bp
        x_g = jnp.einsum('knm,bmc->bknc', S, inp)
        x_g = jnp.transpose(x_g, (0, 2, 1, 3))
        return jnp.einsum('bnki,nkio->bno', x_g, weights) + bias

    ias = jnp.concatenate([x, state], axis=-1)
    zr = jax.nn.sigmoid(avwgcn(ias, wp_g, bp_g))
    z, r = zr[..., :dim_out], zr[..., dim_out:]
    cand = jnp.concatenate([x, z * state], axis=-1)
    hc = jnp.tanh(avwgcn(cand, wp_u, bp_u))
    return r * state + (1.0 - r) * hc


if __name__ == "__main__":
    # Small config consistent with AGCRNCell(node_num, dim_in, dim_out, cheb_k, embed_dim)
    B, node_num, dim_in, dim_out, cheb_k, embed_dim = 2, 16, 4, 32, 3, 8

    key = jax.random.PRNGKey(0)
    ks = jax.random.split(key, 7)
    x = jax.random.normal(ks[0], (B, node_num, dim_in), dtype=jnp.float32)
    state = jax.random.normal(ks[1], (B, node_num, dim_out), dtype=jnp.float32)
    node_embeddings = jax.random.normal(ks[2], (node_num, embed_dim), dtype=jnp.float32)

    cin2 = dim_in + dim_out
    params = (
        jax.random.normal(ks[3], (embed_dim, cheb_k, cin2, 2 * dim_out), dtype=jnp.float32),  # gate weights_pool
        jax.random.normal(ks[4], (embed_dim, 2 * dim_out), dtype=jnp.float32),                # gate bias_pool
        jax.random.normal(ks[5], (embed_dim, cheb_k, cin2, dim_out), dtype=jnp.float32),      # update weights_pool
        jax.random.normal(ks[6], (embed_dim, dim_out), dtype=jnp.float32),                    # update bias_pool
    )

    h = jax.block_until_ready(agcrn_cell_forward(x, state, node_embeddings, params))
    h_ref = jax.block_until_ready(agcrn_cell_reference(x, state, node_embeddings, params))

    assert h.shape == (B, node_num, dim_out)
    err = float(jnp.max(jnp.abs(h - h_ref)))
    assert jnp.allclose(h, h_ref, atol=2e-3, rtol=2e-3), f"max abs err = {err}"
    print("KERNEL_OK")
</pallas_src>

<mosaic_0001>
module attributes {stable_mosaic.version = 11 : i64} {
  func.func @_agcrn_cell_kernel(%arg0: i32, %arg1: memref<16x36xf32, #tpu.memory_space<vmem>>, %arg2: memref<16x32xf32, #tpu.memory_space<vmem>>, %arg3: memref<2x16x16xf32, #tpu.memory_space<vmem>>, %arg4: memref<3x36x512xf32, #tpu.memory_space<vmem>>, %arg5: memref<3x36x256xf32, #tpu.memory_space<vmem>>, %arg6: memref<3x32x256xf32, #tpu.memory_space<vmem>>, %arg7: memref<16x8xf32, #tpu.memory_space<vmem>>, %arg8: memref<16x64xf32, #tpu.memory_space<vmem>>, %arg9: memref<16x32xf32, #tpu.memory_space<vmem>>, %arg10: memref<16x32xf32, #tpu.memory_space<vmem>>) attributes {dimension_semantics = [#tpu.dimension_semantics<parallel>], iteration_bounds = array<i64: 2>, scalar_prefetch = 0 : i64, scratch_operands = 0 : i64, tpu.core_type = #tpu.core_type<tc>, window_params = [{transform_indices = @transform_0, window_bounds = array<i64: 16, 36>}, {transform_indices = @transform_1, window_bounds = array<i64: 16, 32>}, {pipeline_mode = #tpu.pipeline_mode<synchronous>, transform_indices = @transform_2, window_bounds = array<i64: 2, 16, 16>}, {pipeline_mode = #tpu.pipeline_mode<synchronous>, transform_indices = @transform_3, window_bounds = array<i64: 3, 36, 512>}, {pipeline_mode = #tpu.pipeline_mode<synchronous>, transform_indices = @transform_4, window_bounds = array<i64: 3, 36, 256>}, {pipeline_mode = #tpu.pipeline_mode<synchronous>, transform_indices = @transform_5, window_bounds = array<i64: 3, 32, 256>}, {pipeline_mode = #tpu.pipeline_mode<synchronous>, transform_indices = @transform_6, window_bounds = array<i64: 16, 8>}, {pipeline_mode = #tpu.pipeline_mode<synchronous>, transform_indices = @transform_7, window_bounds = array<i64: 16, 64>}, {pipeline_mode = #tpu.pipeline_mode<synchronous>, transform_indices = @transform_8, window_bounds = array<i64: 16, 32>}, {transform_indices = @transform_9, window_bounds = array<i64: 16, 32>}]} {
    %c0 = arith.constant 0 : index
    %c0_0 = arith.constant 0 : index
    %0 = vector.load %arg1[%c0, %c0_0] : memref<16x36xf32, #tpu.memory_space<vmem>>, vector<16x36xf32>
    %c0_1 = arith.constant 0 : index
    %c0_2 = arith.constant 0 : index
    %1 = vector.load %arg2[%c0_1, %c0_2] : memref<16x32xf32, #tpu.memory_space<vmem>>, vector<16x32xf32>
    %c0_3 = arith.constant 0 : index
    %c0_4 = arith.constant 0 : index
    %2 = vector.load %arg7[%c0_3, %c0_4] : memref<16x8xf32, #tpu.memory_space<vmem>>, vector<16x8xf32>
    %c0_5 = arith.constant 0 : index
    %c0_6 = arith.constant 0 : index
    %c0_7 = arith.constant 0 : index
    %3 = vector.load %arg4[%c0_5, %c0_6, %c0_7] : memref<3x36x512xf32, #tpu.memory_space<vmem>>, vector<1x36x512xf32>
    %4 = vector.shape_cast %3 : vector<1x36x512xf32> to vector<36x512xf32>
    %cst = arith.constant dense<0.000000e+00> : vector<16x512xf32>
    %5 = tpu.matmul %0, %4, %cst {dimension_numbers = #tpu.dot_dimension_numbers<[1], [0], [0], [1], [0, 0, 1, 1], [], []>} : vector<16x36xf32>, vector<36x512xf32>, vector<16x512xf32> -> vector<16x512xf32>
    %c0_8 = arith.constant 0 : index
    %c0_9 = arith.constant 0 : index
    %c0_10 = arith.constant 0 : index
    %6 = vector.load %arg3[%c0_8, %c0_9, %c0_10] : memref<2x16x16xf32, #tpu.memory_space<vmem>>, vector<1x16x16xf32>
    %7 = vector.shape_cast %6 : vector<1x16x16xf32> to vector<16x16xf32>
    %cst_11 = arith.constant dense<0.000000e+00> : vector<16x36xf32>
    %8 = tpu.matmul %7, %0, %cst_11 {dimension_numbers = #tpu.dot_dimension_numbers<[1], [0], [0], [1], [0, 0, 1, 1], [], []>} : vector<16x16xf32>, vector<16x36xf32>, vector<16x36xf32> -> vector<16x36xf32>
    %c1 = arith.constant 1 : index
    %c0_12 = arith.constant 0 : index
    %c0_13 = arith.constant 0 : index
    %9 = vector.load %arg4[%c1, %c0_12, %c0_13] : memref<3x36x512xf32, #tpu.memory_space<vmem>>, vector<1x36x512xf32>
    %10 = vector.shape_cast %9 : vector<1x36x512xf32> to vector<36x512xf32>
    %cst_14 = arith.constant dense<0.000000e+00> : vector<16x512xf32>
    %11 = tpu.matmul %8, %10, %cst_14 {dimension_numbers = #tpu.dot_dimension_numbers<[1], [0], [0], [1], [0, 0, 1, 1], [], []>} : vector<16x36xf32>, vector<36x512xf32>, vector<16x512xf32> -> vector<16x512xf32>
    %12 = arith.addf %5, %11 : vector<16x512xf32>
    %c1_15 = arith.constant 1 : index
    %c0_16 = arith.constant 0 : index
    %c0_17 = arith.constant 0 : index
    %13 = vector.load %arg3[%c1_15, %c0_16, %c0_17] : memref<2x16x16xf32, #tpu.memory_space<vmem>>, vector<1x16x16xf32>
    %14 = vector.shape_cast %13 : vector<1x16x16xf32> to vector<16x16xf32>
    %cst_18 = arith.constant dense<0.000000e+00> : vector<16x36xf32>
    %15 = tpu.matmul %14, %0, %cst_18 {dimension_numbers = #tpu.dot_dimension_numbers<[1], [0], [0], [1], [0, 0, 1, 1], [], []>} : vector<16x16xf32>, vector<16x36xf32>, vector<16x36xf32> -> vector<16x36xf32>
    %c2 = arith.constant 2 : index
    %c0_19 = arith.constant 0 : index
    %c0_20 = arith.constant 0 : index
    %16 = vector.load %arg4[%c2, %c0_19, %c0_20] : memref<3x36x512xf32, #tpu.memory_space<vmem>>, vector<1x36x512xf32>
    %17 = vector.shape_cast %16 : vector<1x36x512xf32> to vector<36x512xf32>
    %cst_21 = arith.constant dense<0.000000e+00> : vector<16x512xf32>
    %18 = tpu.matmul %15, %17, %cst_21 {dimension_numbers = #tpu.dot_dimension_numbers<[1], [0], [0], [1], [0, 0, 1, 1], [], []>} : vector<16x36xf32>, vector<36x512xf32>, vector<16x512xf32> -> vector<16x512xf32>
    %19 = arith.addf %12, %18 : vector<16x512xf32>
    %c0_22 = arith.constant 0 : index
    %c0_23 = arith.constant 0 : index
    %20 = vector.load %arg8[%c0_22, %c0_23] : memref<16x64xf32, #tpu.memory_space<vmem>>, vector<16x64xf32>
    %21 = vector.extract_strided_slice %19 {offsets = [0, 0], sizes = [16, 64], strides = [1, 1]} : vector<16x512xf32> to vector<16x64xf32>
    %22 = vector.extract_strided_slice %2 {offsets = [0, 0], sizes = [16, 1], strides = [1, 1]} : vector<16x8xf32> to vector<16x1xf32>
    %23 = vector.broadcast %22 : vector<16x1xf32> to vector<16x64xf32>
    %24 = arith.mulf %21, %23 : vector<16x64xf32>
    %25 = arith.addf %20, %24 : vector<16x64xf32>
    %26 = vector.extract_strided_slice %19 {offsets = [0, 64], sizes = [16, 64], strides = [1, 1]} : vector<16x512xf32> to vector<16x64xf32>
    %27 = vector.extract_strided_slice %2 {offsets = [0, 1], sizes = [16, 1], strides = [1, 1]} : vector<16x8xf32> to vector<16x1xf32>
    %28 = vector.broadcast %27 : vector<16x1xf32> to vector<16x64xf32>
    %29 = arith.mulf %26, %28 : vector<16x64xf32>
    %30 = arith.addf %25, %29 : vector<16x64xf32>
    %31 = vector.extract_strided_slice %19 {offsets = [0, 128], sizes = [16, 64], strides = [1, 1]} : vector<16x512xf32> to vector<16x64xf32>
    %32 = vector.extract_strided_slice %2 {offsets = [0, 2], sizes = [16, 1], strides = [1, 1]} : vector<16x8xf32> to vector<16x1xf32>
    %33 = vector.broadcast %32 : vector<16x1xf32> to vector<16x64xf32>
    %34 = arith.mulf %31, %33 : vector<16x64xf32>
    %35 = arith.addf %30, %34 : vector<16x64xf32>
    %36 = vector.extract_strided_slice %19 {offsets = [0, 192], sizes = [16, 64], strides = [1, 1]} : vector<16x512xf32> to vector<16x64xf32>
    %37 = vector.extract_strided_slice %2 {offsets = [0, 3], sizes = [16, 1], strides = [1, 1]} : vector<16x8xf32> to vector<16x1xf32>
    %38 = vector.broadcast %37 : vector<16x1xf32> to vector<16x64xf32>
    %39 = arith.mulf %36, %38 : vector<16x64xf32>
    %40 = arith.addf %35, %39 : vector<16x64xf32>
    %41 = vector.extract_strided_slice %19 {offsets = [0, 256], sizes = [16, 64], strides = [1, 1]} : vector<16x512xf32> to vector<16x64xf32>
    %42 = vector.extract_strided_slice %2 {offsets = [0, 4], sizes = [16, 1], strides = [1, 1]} : vector<16x8xf32> to vector<16x1xf32>
    %43 = vector.broadcast %42 : vector<16x1xf32> to vector<16x64xf32>
    %44 = arith.mulf %41, %43 : vector<16x64xf32>
    %45 = arith.addf %40, %44 : vector<16x64xf32>
    %46 = vector.extract_strided_slice %19 {offsets = [0, 320], sizes = [16, 64], strides = [1, 1]} : vector<16x512xf32> to vector<16x64xf32>
    %47 = vector.extract_strided_slice %2 {offsets = [0, 5], sizes = [16, 1], strides = [1, 1]} : vector<16x8xf32> to vector<16x1xf32>
    %48 = vector.broadcast %47 : vector<16x1xf32> to vector<16x64xf32>
    %49 = arith.mulf %46, %48 : vector<16x64xf32>
    %50 = arith.addf %45, %49 : vector<16x64xf32>
    %51 = vector.extract_strided_slice %19 {offsets = [0, 384], sizes = [16, 64], strides = [1, 1]} : vector<16x512xf32> to vector<16x64xf32>
    %52 = vector.extract_strided_slice %2 {offsets = [0, 6], sizes = [16, 1], strides = [1, 1]} : vector<16x8xf32> to vector<16x1xf32>
    %53 = vector.broadcast %52 : vector<16x1xf32> to vector<16x64xf32>
    %54 = arith.mulf %51, %53 : vector<16x64xf32>
    %55 = arith.addf %50, %54 : vector<16x64xf32>
    %56 = vector.extract_strided_slice %19 {offsets = [0, 448], sizes = [16, 64], strides = [1, 1]} : vector<16x512xf32> to vector<16x64xf32>
    %57 = vector.extract_strided_slice %2 {offsets = [0, 7], sizes = [16, 1], strides = [1, 1]} : vector<16x8xf32> to vector<16x1xf32>
    %58 = vector.broadcast %57 : vector<16x1xf32> to vector<16x64xf32>
    %59 = arith.mulf %56, %58 : vector<16x64xf32>
    %60 = arith.addf %55, %59 : vector<16x64xf32>
    %61 = arith.negf %60 : vector<16x64xf32>
    %62 = math.exp %61 : vector<16x64xf32>
    %cst_24 = arith.constant 1.000000e+00 : f32
    %63 = vector.broadcast %cst_24 : f32 to vector<16x64xf32>
    %64 = arith.addf %63, %62 : vector<16x64xf32>
    %65 = arith.divf %63, %64 : vector<16x64xf32>
    %66 = vector.extract_strided_slice %65 {offsets = [0, 0], sizes = [16, 32], strides = [1, 1]} : vector<16x64xf32> to vector<16x32xf32>
    %67 = vector.extract_strided_slice %65 {offsets = [0, 32], sizes = [16, 32], strides = [1, 1]} : vector<16x64xf32> to vector<16x32xf32>
    %68 = arith.mulf %66, %1 : vector<16x32xf32>
    %c0_25 = arith.constant 0 : index
    %c0_26 = arith.constant 0 : index
    %c0_27 = arith.constant 0 : index
    %69 = vector.load %arg5[%c0_25, %c0_26, %c0_27] : memref<3x36x256xf32, #tpu.memory_space<vmem>>, vector<1x36x256xf32>
    %70 = vector.shape_cast %69 : vector<1x36x256xf32> to vector<36x256xf32>
    %cst_28 = arith.constant dense<0.000000e+00> : vector<16x256xf32>
    %71 = tpu.matmul %0, %70, %cst_28 {dimension_numbers = #tpu.dot_dimension_numbers<[1], [0], [0], [1], [0, 0, 1, 1], [], []>} : vector<16x36xf32>, vector<36x256xf32>, vector<16x256xf32> -> vector<16x256xf32>
    %c0_29 = arith.constant 0 : index
    %c0_30 = arith.constant 0 : index
    %c0_31 = arith.constant 0 : index
    %72 = vector.load %arg6[%c0_29, %c0_30, %c0_31] : memref<3x32x256xf32, #tpu.memory_space<vmem>>, vector<1x32x256xf32>
    %73 = vector.shape_cast %72 : vector<1x32x256xf32> to vector<32x256xf32>
    %cst_32 = arith.constant dense<0.000000e+00> : vector<16x256xf32>
    %74 = tpu.matmul %68, %73, %cst_32 {dimension_numbers = #tpu.dot_dimension_numbers<[1], [0], [0], [1], [0, 0, 1, 1], [], []>} : vector<16x32xf32>, vector<32x256xf32>, vector<16x256xf32> -> vector<16x256xf32>
    %75 = arith.addf %71, %74 : vector<16x256xf32>
    %c0_33 = arith.constant 0 : index
    %c0_34 = arith.constant 0 : index
    %c0_35 = arith.constant 0 : index
    %76 = vector.load %arg3[%c0_33, %c0_34, %c0_35] : memref<2x16x16xf32, #tpu.memory_space<vmem>>, vector<1x16x16xf32>
    %77 = vector.shape_cast %76 : vector<1x16x16xf32> to vector<16x16xf32>
    %cst_36 = arith.constant dense<0.000000e+00> : vector<16x32xf32>
    %78 = tpu.matmul %77, %68, %cst_36 {dimension_numbers = #tpu.dot_dimension_numbers<[1], [0], [0], [1], [0, 0, 1, 1], [], []>} : vector<16x16xf32>, vector<16x32xf32>, vector<16x32xf32> -> vector<16x32xf32>
    %c1_37 = arith.constant 1 : index
    %c0_38 = arith.constant 0 : index
    %c0_39 = arith.constant 0 : index
    %79 = vector.load %arg5[%c1_37, %c0_38, %c0_39] : memref<3x36x256xf32, #tpu.memory_space<vmem>>, vector<1x36x256xf32>
    %80 = vector.shape_cast %79 : vector<1x36x256xf32> to vector<36x256xf32>
    %cst_40 = arith.constant dense<0.000000e+00> : vector<16x256xf32>
    %81 = tpu.matmul %8, %80, %cst_40 {dimension_numbers = #tpu.dot_dimension_numbers<[1], [0], [0], [1], [0, 0, 1, 1], [], []>} : vector<16x36xf32>, vector<36x256xf32>, vector<16x256xf32> -> vector<16x256xf32>
    %82 = arith.addf %75, %81 : vector<16x256xf32>
    %c1_41 = arith.constant 1 : index
    %c0_42 = arith.constant 0 : index
    %c0_43 = arith.constant 0 : index
    %83 = vector.load %arg6[%c1_41, %c0_42, %c0_43] : memref<3x32x256xf32, #tpu.memory_space<vmem>>, vector<1x32x256xf32>
    %84 = vector.shape_cast %83 : vector<1x32x256xf32> to vector<32x256xf32>
    %cst_44 = arith.constant dense<0.000000e+00> : vector<16x256xf32>
    %85 = tpu.matmul %78, %84, %cst_44 {dimension_numbers = #tpu.dot_dimension_numbers<[1], [0], [0], [1], [0, 0, 1, 1], [], []>} : vector<16x32xf32>, vector<32x256xf32>, vector<16x256xf32> -> vector<16x256xf32>
    %86 = arith.addf %82, %85 : vector<16x256xf32>
    %c1_45 = arith.constant 1 : index
    %c0_46 = arith.constant 0 : index
    %c0_47 = arith.constant 0 : index
    %87 = vector.load %arg3[%c1_45, %c0_46, %c0_47] : memref<2x16x16xf32, #tpu.memory_space<vmem>>, vector<1x16x16xf32>
    %88 = vector.shape_cast %87 : vector<1x16x16xf32> to vector<16x16xf32>
    %cst_48 = arith.constant dense<0.000000e+00> : vector<16x32xf32>
    %89 = tpu.matmul %88, %68, %cst_48 {dimension_numbers = #tpu.dot_dimension_numbers<[1], [0], [0], [1], [0, 0, 1, 1], [], []>} : vector<16x16xf32>, vector<16x32xf32>, vector<16x32xf32> -> vector<16x32xf32>
    %c2_49 = arith.constant 2 : index
    %c0_50 = arith.constant 0 : index
    %c0_51 = arith.constant 0 : index
    %90 = vector.load %arg5[%c2_49, %c0_50, %c0_51] : memref<3x36x256xf32, #tpu.memory_space<vmem>>, vector<1x36x256xf32>
    %91 = vector.shape_cast %90 : vector<1x36x256xf32> to vector<36x256xf32>
    %cst_52 = arith.constant dense<0.000000e+00> : vector<16x256xf32>
    %92 = tpu.matmul %15, %91, %cst_52 {dimension_numbers = #tpu.dot_dimension_numbers<[1], [0], [0], [1], [0, 0, 1, 1], [], []>} : vector<16x36xf32>, vector<36x256xf32>, vector<16x256xf32> -> vector<16x256xf32>
    %93 = arith.addf %86, %92 : vector<16x256xf32>
    %c2_53 = arith.constant 2 : index
    %c0_54 = arith.constant 0 : index
    %c0_55 = arith.constant 0 : index
    %94 = vector.load %arg6[%c2_53, %c0_54, %c0_55] : memref<3x32x256xf32, #tpu.memory_space<vmem>>, vector<1x32x256xf32>
    %95 = vector.shape_cast %94 : vector<1x32x256xf32> to vector<32x256xf32>
    %cst_56 = arith.constant dense<0.000000e+00> : vector<16x256xf32>
    %96 = tpu.matmul %89, %95, %cst_56 {dimension_numbers = #tpu.dot_dimension_numbers<[1], [0], [0], [1], [0, 0, 1, 1], [], []>} : vector<16x32xf32>, vector<32x256xf32>, vector<16x256xf32> -> vector<16x256xf32>
    %97 = arith.addf %93, %96 : vector<16x256xf32>
    %c0_57 = arith.constant 0 : index
    %c0_58 = arith.constant 0 : index
    %98 = vector.load %arg9[%c0_57, %c0_58] : memref<16x32xf32, #tpu.memory_space<vmem>>, vector<16x32xf32>
    %99 = vector.extract_strided_slice %97 {offsets = [0, 0], sizes = [16, 32], strides = [1, 1]} : vector<16x256xf32> to vector<16x32xf32>
    %100 = vector.extract_strided_slice %2 {offsets = [0, 0], sizes = [16, 1], strides = [1, 1]} : vector<16x8xf32> to vector<16x1xf32>
    %101 = vector.broadcast %100 : vector<16x1xf32> to vector<16x32xf32>
    %102 = arith.mulf %99, %101 : vector<16x32xf32>
    %103 = arith.addf %98, %102 : vector<16x32xf32>
    %104 = vector.extract_strided_slice %97 {offsets = [0, 32], sizes = [16, 32], strides = [1, 1]} : vector<16x256xf32> to vector<16x32xf32>
    %105 = vector.extract_strided_slice %2 {offsets = [0, 1], sizes = [16, 1], strides = [1, 1]} : vector<16x8xf32> to vector<16x1xf32>
    %106 = vector.broadcast %105 : vector<16x1xf32> to vector<16x32xf32>
    %107 = arith.mulf %104, %106 : vector<16x32xf32>
    %108 = arith.addf %103, %107 : vector<16x32xf32>
    %109 = vector.extract_strided_slice %97 {offsets = [0, 64], sizes = [16, 32], strides = [1, 1]} : vector<16x256xf32> to vector<16x32xf32>
    %110 = vector.extract_strided_slice %2 {offsets = [0, 2], sizes = [16, 1], strides = [1, 1]} : vector<16x8xf32> to vector<16x1xf32>
    %111 = vector.broadcast %110 : vector<16x1xf32> to vector<16x32xf32>
    %112 = arith.mulf %109, %111 : vector<16x32xf32>
    %113 = arith.addf %108, %112 : vector<16x32xf32>
    %114 = vector.extract_strided_slice %97 {offsets = [0, 96], sizes = [16, 32], strides = [1, 1]} : vector<16x256xf32> to vector<16x32xf32>
    %115 = vector.extract_strided_slice %2 {offsets = [0, 3], sizes = [16, 1], strides = [1, 1]} : vector<16x8xf32> to vector<16x1xf32>
    %116 = vector.broadcast %115 : vector<16x1xf32> to vector<16x32xf32>
    %117 = arith.mulf %114, %116 : vector<16x32xf32>
    %118 = arith.addf %113, %117 : vector<16x32xf32>
    %119 = vector.extract_strided_slice %97 {offsets = [0, 128], sizes = [16, 32], strides = [1, 1]} : vector<16x256xf32> to vector<16x32xf32>
    %120 = vector.extract_strided_slice %2 {offsets = [0, 4], sizes = [16, 1], strides = [1, 1]} : vector<16x8xf32> to vector<16x1xf32>
    %121 = vector.broadcast %120 : vector<16x1xf32> to vector<16x32xf32>
    %122 = arith.mulf %119, %121 : vector<16x32xf32>
    %123 = arith.addf %118, %122 : vector<16x32xf32>
    %124 = vector.extract_strided_slice %97 {offsets = [0, 160], sizes = [16, 32], strides = [1, 1]} : vector<16x256xf32> to vector<16x32xf32>
    %125 = vector.extract_strided_slice %2 {offsets = [0, 5], sizes = [16, 1], strides = [1, 1]} : vector<16x8xf32> to vector<16x1xf32>
    %126 = vector.broadcast %125 : vector<16x1xf32> to vector<16x32xf32>
    %127 = arith.mulf %124, %126 : vector<16x32xf32>
    %128 = arith.addf %123, %127 : vector<16x32xf32>
    %129 = vector.extract_strided_slice %97 {offsets = [0, 192], sizes = [16, 32], strides = [1, 1]} : vector<16x256xf32> to vector<16x32xf32>
    %130 = vector.extract_strided_slice %2 {offsets = [0, 6], sizes = [16, 1], strides = [1, 1]} : vector<16x8xf32> to vector<16x1xf32>
    %131 = vector.broadcast %130 : vector<16x1xf32> to vector<16x32xf32>
    %132 = arith.mulf %129, %131 : vector<16x32xf32>
    %133 = arith.addf %128, %132 : vector<16x32xf32>
    %134 = vector.extract_strided_slice %97 {offsets = [0, 224], sizes = [16, 32], strides = [1, 1]} : vector<16x256xf32> to vector<16x32xf32>
    %135 = vector.extract_strided_slice %2 {offsets = [0, 7], sizes = [16, 1], strides = [1, 1]} : vector<16x8xf32> to vector<16x1xf32>
    %136 = vector.broadcast %135 : vector<16x1xf32> to vector<16x32xf32>
    %137 = arith.mulf %134, %136 : vector<16x32xf32>
    %138 = arith.addf %133, %137 : vector<16x32xf32>
    %139 = math.tanh %138 : vector<16x32xf32>
    %140 = arith.mulf %67, %1 : vector<16x32xf32>
    %cst_59 = arith.constant 1.000000e+00 : f32
    %141 = vector.broadcast %cst_59 : f32 to vector<16x32xf32>
    %142 = arith.subf %141, %67 : vector<16x32xf32>
    %143 = arith.mulf %142, %139 : vector<16x32xf32>
    %144 = arith.addf %140, %143 : vector<16x32xf32>
    %c0_60 = arith.constant 0 : index
    %c0_61 = arith.constant 0 : index
    %145 = vector.load %arg10[%c0_60, %c0_61] : memref<16x32xf32, #tpu.memory_space<vmem>>, vector<16x32xf32>
    tpu.vector_store %arg10[%c0_60, %c0_61], %144 {strides = array<i32>} : memref<16x32xf32, #tpu.memory_space<vmem>>, vector<16x32xf32>,
    return
  }
  func.func @transform_0(%arg0: i32) -> (i32, i32) {
    %c0_i32 = arith.constant 0 : i32
    %c0_i32_0 = arith.constant 0 : i32
    return %arg0, %c0_i32 : i32, i32
  }
  func.func @transform_1(%arg0: i32) -> (i32, i32) {
    %c0_i32 = arith.constant 0 : i32
    %c0_i32_0 = arith.constant 0 : i32
    return %arg0, %c0_i32 : i32, i32
  }
  func.func @transform_2(%arg0: i32) -> (i32, i32, i32) {
    %c0_i32 = arith.constant 0 : i32
    %c0_i32_0 = arith.constant 0 : i32
    %c0_i32_1 = arith.constant 0 : i32
    %c0_i32_2 = arith.constant 0 : i32
    return %c0_i32, %c0_i32_0, %c0_i32_1 : i32, i32, i32
  }
  func.func @transform_3(%arg0: i32) -> (i32, i32, i32) {
    %c0_i32 = arith.constant 0 : i32
    %c0_i32_0 = arith.constant 0 : i32
    %c0_i32_1 = arith.constant 0 : i32
    %c0_i32_2 = arith.constant 0 : i32
    return %c0_i32, %c0_i32_0, %c0_i32_1 : i32, i32, i32
  }
  func.func @transform_4(%arg0: i32) -> (i32, i32, i32) {
    %c0_i32 = arith.constant 0 : i32
    %c0_i32_0 = arith.constant 0 : i32
    %c0_i32_1 = arith.constant 0 : i32
    %c0_i32_2 = arith.constant 0 : i32
    return %c0_i32, %c0_i32_0, %c0_i32_1 : i32, i32, i32
  }
  func.func @transform_5(%arg0: i32) -> (i32, i32, i32) {
    %c0_i32 = arith.constant 0 : i32
    %c0_i32_0 = arith.constant 0 : i32
    %c0_i32_1 = arith.constant 0 : i32
    %c0_i32_2 = arith.constant 0 : i32
    return %c0_i32, %c0_i32_0, %c0_i32_1 : i32, i32, i32
  }
  func.func @transform_6(%arg0: i32) -> (i32, i32) {
    %c0_i32 = arith.constant 0 : i32
    %c0_i32_0 = arith.constant 0 : i32
    %c0_i32_1 = arith.constant 0 : i32
    return %c0_i32, %c0_i32_0 : i32, i32
  }
  func.func @transform_7(%arg0: i32) -> (i32, i32) {
    %c0_i32 = arith.constant 0 : i32
    %c0_i32_0 = arith.constant 0 : i32
    %c0_i32_1 = arith.constant 0 : i32
    return %c0_i32, %c0_i32_0 : i32, i32
  }
  func.func @transform_8(%arg0: i32) -> (i32, i32) {
    %c0_i32 = arith.constant 0 : i32
    %c0_i32_0 = arith.constant 0 : i32
    %c0_i32_1 = arith.constant 0 : i32
    return %c0_i32, %c0_i32_0 : i32, i32
  }
  func.func @transform_9(%arg0: i32) -> (i32, i32) {
    %c0_i32 = arith.constant 0 : i32
    %c0_i32_0 = arith.constant 0 : i32
    return %arg0, %c0_i32 : i32, i32
  }
}

</mosaic_0001>

<llo_original>
// kernel: tpu_custom_call.1
$region0: #{tpu_custom_call.1}
  #allocation0 [shape = 'u32[]', space=smem, size = 0x4, offset = 0x4, fixed_abs, tag = 'smem constant byte address 0x4 - core index']
  #allocation1 [shape = 'u32[144,128]{1,0:T(1,128)}', space=vmem, size = 0x12000, scoped, tag = 'internal scratch']
  %s0 = inlined_call_operand.hbm [shape: f32[32,36], index: 0, kind: input, shape index: {}]
  %s1 = inlined_call_operand.hbm [shape: f32[32,32], index: 1, kind: input, shape index: {}]
  %s2 = inlined_call_operand.hbm [shape: f32[2,16,16], index: 2, kind: input, shape index: {}]
  %s3 = inlined_call_operand.hbm [shape: f32[3,36,512], index: 3, kind: input, shape index: {}]
  %s4 = inlined_call_operand.hbm [shape: f32[3,36,256], index: 4, kind: input, shape index: {}]
  %s5 = inlined_call_operand.hbm [shape: f32[3,32,256], index: 5, kind: input, shape index: {}]
  %s6 = inlined_call_operand.vmem [shape: f32[16,8], index: 6, kind: input, shape index: {}]
  %s7 = inlined_call_operand.vmem [shape: f32[16,64], index: 7, kind: input, shape index: {}]
  %s8 = inlined_call_operand.vmem [shape: f32[16,32], index: 8, kind: input, shape index: {}]
  %s9 = inlined_call_operand.hbm [shape: f32[32,32], index: 9, kind: output, shape index: {}]
  %s10 = sld [smem:[#allocation0]]
  $region93: #{tpu_custom_call.1} parent=0
    _
  %s12 = ssub.s32 1, %s10
  %s13 = scalar_select 0, %s12, %s10
  $region1: #{tpu_custom_call.1} parent=0
    #allocation2 [shape = 'u8[16384]{0}', space=vmem, size = 0x4000, scoped, tag = 'input window, operand 0']
    #allocation3 [shape = 's32[2]{0}', space=sflag, size = 0x8, scoped, tag = 'scoped memory for tpu_custom_call.1']
    #allocation4 [shape = 's32[2]{0}', space=sflag, size = 0x8, scoped, tag = 'scoped memory for tpu_custom_call.1']
    #allocation5 [shape = 'u8[16384]{0}', space=vmem, size = 0x4000, scoped, tag = 'input window, operand 1']
    #allocation6 [shape = 's32[2]{0}', space=sflag, size = 0x8, scoped, tag = 'scoped memory for tpu_custom_call.1']
    #allocation7 [shape = 'u8[16384]{0}', space=vmem, size = 0x4000, scoped, tag = 'input window, operand 2, single buffered']
    #allocation8 [shape = 'u8[245760]{0}', space=vmem, size = 0x3c000, scoped, tag = 'input window, operand 3, single buffered']
    #allocation9 [shape = 's32[1]{0}', space=sflag, size = 0x4, scoped, tag = 'scoped memory for tpu_custom_call.1']
    #allocation10 [shape = 'u8[122880]{0}', space=vmem, size = 0x1e000, scoped, tag = 'input window, operand 4, single buffered']
    #allocation11 [shape = 'u8[98304]{0}', space=vmem, size = 0x18000, scoped, tag = 'input window, operand 5, single buffered']
    #allocation12 [shape = 's32[1]{0}', space=sflag, size = 0x4, scoped, tag = 'scoped memory for tpu_custom_call.1']
    #allocation13 [shape = 'u8[16384]{0}', space=vmem, size = 0x4000, scoped, tag = 'output window, operand 0']
    %14 = vsyncpa [#allocation3], 0
    %s15 = scalar_lea.sflag [#allocation3], 1
    %16 = vsyncpa %s15, 0
    %17 = vsyncpa [#allocation6], 0
    %s18 = scalar_lea.sflag [#allocation6], 1
    %19 = vsyncpa %s18, 0
    %20 = vsyncpa [#allocation9], 0
    %21 = vsyncpa [#allocation12], 0
    %22 = vsyncpa [#allocation4], 0
    %s23 = scalar_lea.sflag [#allocation4], 1
    %24 = vsyncpa %s23, 0
    loop: start=0, step=1, limit=4
    $region2: #{tpu_custom_call.1} parent=1 // loop_pre_header
      _
    $region3: #{tpu_custom_call.1} parent=1 // loop_header
      %s26 = sphi 0, %s30
      %p27 = scmp.ge.s32.totalorder %s26, 4
      %s36 = sphi 0, %s38
      %s39 = sphi 0, %s36
      %s40 = sphi 0, %s39
      %s56 = sphi 0, %s40
      %s62 = sphi 0, %s64
      %s65 = sphi 0, %s62
      %s66 = sphi 0, %s65
      %s82 = sphi 0, %s66
      %s86 = sphi 0, %s86
      %s88 = sphi 0, %s86
      %s89 = sphi 0, %s88
      %s103 = sphi 0, %s89
      %s107 = sphi 0, %s107
      %s109 = sphi 0, %s107
      %s110 = sphi 0, %s109
      %s124 = sphi 0, %s110
      %s128 = sphi 0, %s128
      %s130 = sphi 0, %s128
      %s131 = sphi 0, %s130
      %s145 = sphi 0, %s131
      %s149 = sphi 0, %s149
      %s151 = sphi 0, %s149
      %s152 = sphi 0, %s151
      %s166 = sphi 0, %s152
      %s170 = sphi 0, %s170
      %s172 = sphi 0, %s170
      %s173 = sphi 0, %s172
      %s187 = sphi 0, %s173
      %s191 = sphi 0, %s191
      %s193 = sphi 0, %s191
      %s194 = sphi 0, %s193
      %s208 = sphi 0, %s194
      %s212 = sphi 0, %s212
      %s214 = sphi 0, %s212
      %s215 = sphi 0, %s214
      %s229 = sphi 0, %s215
      %s235 = sphi 0, %s237
      %s238 = sphi 0, %s235
      %s239 = sphi 0, %s238
      %s255 = sphi 0, %s239
    $region4: #{tpu_custom_call.1} parent=1 // loop_header_branch
      %29 = sbr.rel (%p27) target = $region8
    $region5: #{tpu_custom_call.1} parent=1 // loop_body
      %s31 = ssub.s32 %s26, 1
      %s32 = ssub.s32 %s26, 2
      %s33 = sadd.s32 %s26, 1
      %s34 = ssub.s32 %s26, %s33
      %p35 = scmp.eq.s32.totalorder %s34, 0
      %s37 = sadd.s32 %s36, 1
      %s38 = scalar_select %p35, %s36, %s37
      %p41 = pneg %p35
      %p42 = scmp.eq.s32.totalorder %s26, 1
      %p43 = por %p41, %p42
      %p44 = scmp.ne.s32.totalorder %s36, %s39
      %p45 = scmp.eq.s32.totalorder %s26, 0
      %p46 = por %p44, %p45
      %p47 = scmp.ne.s32.totalorder %s36, %s39
      %p48 = scmp.eq.s32.totalorder %s31, 1
      %p49 = por %p47, %p48
      %p50 = scmp.ne.s32.totalorder %s39, %s40
      %p51 = scmp.eq.s32.totalorder %s31, 0
      %p52 = por %p50, %p51
      %p53 = scmp.ne.s32.totalorder %s39, %s40
      %p54 = scmp.eq.s32.totalorder %s32, 1
      %p55 = por %p53, %p54
      %p57 = scmp.ne.s32.totalorder %s40, %s56
      %p58 = scmp.eq.s32.totalorder %s32, 0
      %p59 = por %p57, %p58
      %s60 = ssub.s32 %s26, %s33
      %p61 = scmp.eq.s32.totalorder %s60, 0
      %s63 = sadd.s32 %s62, 1
      %s64 = scalar_select %p61, %s62, %s63
      %p67 = pneg %p61
      %p68 = scmp.eq.s32.totalorder %s26, 1
      %p69 = por %p67, %p68
      %p70 = scmp.ne.s32.totalorder %s62, %s65
      %p71 = scmp.eq.s32.totalorder %s26, 0
      %p72 = por %p70, %p71
      %p73 = scmp.ne.s32.totalorder %s62, %s65
      %p74 = scmp.eq.s32.totalorder %s31, 1
      %p75 = por %p73, %p74
      %p76 = scmp.ne.s32.totalorder %s65, %s66
      %p77 = scmp.eq.s32.totalorder %s31, 0
      %p78 = por %p76, %p77
      %p79 = scmp.ne.s32.totalorder %s65, %s66
      %p80 = scmp.eq.s32.totalorder %s32, 1
      %p81 = por %p79, %p80
      %p83 = scmp.ne.s32.totalorder %s66, %s82
      %p84 = scmp.eq.s32.totalorder %s32, 0
      %p85 = por %p83, %p84
      %s87 = sadd.s32 %s86, 1
      %p90 = scmp.eq.s32.totalorder %s26, 1
      %p91 = scmp.ne.s32.totalorder %s86, %s88
      %p92 = scmp.eq.s32.totalorder %s26, 0
      %p93 = por %p91, %p92
      %p94 = scmp.ne.s32.totalorder %s86, %s88
      %p95 = scmp.eq.s32.totalorder %s31, 1
      %p96 = por %p94, %p95
      %p97 = scmp.ne.s32.totalorder %s88, %s89
      %p98 = scmp.eq.s32.totalorder %s31, 0
      %p99 = por %p97, %p98
      %p100 = scmp.ne.s32.totalorder %s88, %s89
      %p101 = scmp.eq.s32.totalorder %s32, 1
      %p102 = por %p100, %p101
      %p104 = scmp.ne.s32.totalorder %s89, %s103
      %p105 = scmp.eq.s32.totalorder %s32, 0
      %p106 = por %p104, %p105
      %s108 = sadd.s32 %s107, 1
      %p111 = scmp.eq.s32.totalorder %s26, 1
      %p112 = scmp.ne.s32.totalorder %s107, %s109
      %p113 = scmp.eq.s32.totalorder %s26, 0
      %p114 = por %p112, %p113
      %p115 = scmp.ne.s32.totalorder %s107, %s109
      %p116 = scmp.eq.s32.totalorder %s31, 1
      %p117 = por %p115, %p116
      %p118 = scmp.ne.s32.totalorder %s109, %s110
      %p119 = scmp.eq.s32.totalorder %s31, 0
      %p120 = por %p118, %p119
      %p121 = scmp.ne.s32.totalorder %s109, %s110
      %p122 = scmp.eq.s32.totalorder %s32, 1
      %p123 = por %p121, %p122
      %p125 = scmp.ne.s32.totalorder %s110, %s124
      %p126 = scmp.eq.s32.totalorder %s32, 0
      %p127 = por %p125, %p126
      %s129 = sadd.s32 %s128, 1
      %p132 = scmp.eq.s32.totalorder %s26, 1
      %p133 = scmp.ne.s32.totalorder %s128, %s130
      %p134 = scmp.eq.s32.totalorder %s26, 0
      %p135 = por %p133, %p134
      %p136 = scmp.ne.s32.totalorder %s128, %s130
      %p137 = scmp.eq.s32.totalorder %s31, 1
      %p138 = por %p136, %p137
      %p139 = scmp.ne.s32.totalorder %s130, %s131
      %p140 = scmp.eq.s32.totalorder %s31, 0
      %p141 = por %p139, %p140
      %p142 = scmp.ne.s32.totalorder %s130, %s131
      %p143 = scmp.eq.s32.totalorder %s32, 1
      %p144 = por %p142, %p143
      %p146 = scmp.ne.s32.totalorder %s131, %s145
      %p147 = scmp.eq.s32.totalorder %s32, 0
      %p148 = por %p146, %p147
      %s150 = sadd.s32 %s149, 1
      %p153 = scmp.eq.s32.totalorder %s26, 1
      %p154 = scmp.ne.s32.totalorder %s149, %s151
      %p155 = scmp.eq.s32.totalorder %s26, 0
      %p156 = por %p154, %p155
      %p157 = scmp.ne.s32.totalorder %s149, %s151
      %p158 = scmp.eq.s32.totalorder %s31, 1
      %p159 = por %p157, %p158
      %p160 = scmp.ne.s32.totalorder %s151, %s152
      %p161 = scmp.eq.s32.totalorder %s31, 0
      %p162 = por %p160, %p161
      %p163 = scmp.ne.s32.totalorder %s151, %s152
      %p164 = scmp.eq.s32.totalorder %s32, 1
      %p165 = por %p163, %p164
      %p167 = scmp.ne.s32.totalorder %s152, %s166
      %p168 = scmp.eq.s32.totalorder %s32, 0
      %p169 = por %p167, %p168
      %s171 = sadd.s32 %s170, 1
      %p174 = scmp.eq.s32.totalorder %s26, 1
      %p175 = scmp.ne.s32.totalorder %s170, %s172
      %p176 = scmp.eq.s32.totalorder %s26, 0
      %p177 = por %p175, %p176
      %p178 = scmp.ne.s32.totalorder %s170, %s172
      %p179 = scmp.eq.s32.totalorder %s31, 1
      %p180 = por %p178, %p179
      %p181 = scmp.ne.s32.totalorder %s172, %s173
      %p182 = scmp.eq.s32.totalorder %s31, 0
      %p183 = por %p181, %p182
      %p184 = scmp.ne.s32.totalorder %s172, %s173
      %p185 = scmp.eq.s32.totalorder %s32, 1
      %p186 = por %p184, %p185
      %p188 = scmp.ne.s32.totalorder %s173, %s187
      %p189 = scmp.eq.s32.totalorder %s32, 0
      %p190 = por %p188, %p189
      %s192 = sadd.s32 %s191, 1
      %p195 = scmp.eq.s32.totalorder %s26, 1
      %p196 = scmp.ne.s32.totalorder %s191, %s193
      %p197 = scmp.eq.s32.totalorder %s26, 0
      %p198 = por %p196, %p197
      %p199 = scmp.ne.s32.totalorder %s191, %s193
      %p200 = scmp.eq.s32.totalorder %s31, 1
      %p201 = por %p199, %p200
      %p202 = scmp.ne.s32.totalorder %s193, %s194
      %p203 = scmp.eq.s32.totalorder %s31, 0
      %p204 = por %p202, %p203
      %p205 = scmp.ne.s32.totalorder %s193, %s194
      %p206 = scmp.eq.s32.totalorder %s32, 1
      %p207 = por %p205, %p206
      %p209 = scmp.ne.s32.totalorder %s194, %s208
      %p210 = scmp.eq.s32.totalorder %s32, 0
      %p211 = por %p209, %p210
      %s213 = sadd.s32 %s212, 1
      %p216 = scmp.eq.s32.totalorder %s26, 1
      %p217 = scmp.ne.s32.totalorder %s212, %s214
      %p218 = scmp.eq.s32.totalorder %s26, 0
      %p219 = por %p217, %p218
      %p220 = scmp.ne.s32.totalorder %s212, %s214
      %p221 = scmp.eq.s32.totalorder %s31, 1
      %p222 = por %p220, %p221
      %p223 = scmp.ne.s32.totalorder %s214, %s215
      %p224 = scmp.eq.s32.totalorder %s31, 0
      %p225 = por %p223, %p224
      %p226 = scmp.ne.s32.totalorder %s214, %s215
      %p227 = scmp.eq.s32.totalorder %s32, 1
      %p228 = por %p226, %p227
      %p230 = scmp.ne.s32.totalorder %s215, %s229
      %p231 = scmp.eq.s32.totalorder %s32, 0
      %p232 = por %p230, %p231
      %s233 = ssub.s32 %s26, %s33
      %p234 = scmp.eq.s32.totalorder %s233, 0
      %s236 = sadd.s32 %s235, 1
      %s237 = scalar_select %p234, %s235, %s236
      %p240 = pneg %p234
      %p241 = scmp.eq.s32.totalorder %s26, 1
      %p242 = por %p240, %p241
      %p243 = scmp.ne.s32.totalorder %s235, %s238
      %p244 = scmp.eq.s32.totalorder %s26, 0
      %p245 = por %p243, %p244
      %p246 = scmp.ne.s32.totalorder %s235, %s238
      %p247 = scmp.eq.s32.totalorder %s31, 1
      %p248 = por %p246, %p247
      %p249 = scmp.ne.s32.totalorder %s238, %s239
      %p250 = scmp.eq.s32.totalorder %s31, 0
      %p251 = por %p249, %p250
      %p252 = scmp.ne.s32.totalorder %s238, %s239
      %p253 = scmp.eq.s32.totalorder %s32, 1
      %p254 = por %p252, %p253
      %p256 = scmp.ne.s32.totalorder %s239, %s255
      %p257 = scmp.eq.s32.totalorder %s32, 0
      %p258 = por %p256, %p257
      %p259 = scmp.le.s32.totalorder 1, %s26
      %p260 = scmp.lt.s32.totalorder %s26, 3
      %p261 = pnand %p259, %p260
      %p262 = pneg %p261
      // Predicated region
      $region9: #{tpu_custom_call.1} parent=5 // pred_check
        _
      $region10: #{tpu_custom_call.1} parent=5 // pred_check_branch
        %264 = sbr.rel (%p261) target = $region12
      $region11: #{tpu_custom_call.1} parent=5 // pred_region
        %s265 = ssub.s32 %s26, 1
        // Predicated region
        $region13: #{tpu_custom_call.1} parent=11 // pred_check
          %p266 = pneg %p99
        $region14: #{tpu_custom_call.1} parent=11 // pred_check_branch
          %268 = sbr.rel (%p266) target = $region16
        $region15: #{tpu_custom_call.1} parent=11 // pred_region
          %s270 = ssub.s32 512, 512
          %271 = vsyncadd [#allocation6], %s270
          %s272 = sshll.u32 [#allocation7], 4
          %s273 = int_to_ptr.vmem [resolvable:$true] %s272
          %278 = dma.hbm_to_vmem [thread:$0]  %s2, 512, %s273, [#allocation6], 128, 128, 8
        $region16: #{tpu_custom_call.1} parent=11 // pred_fallthru
          _
        // Predicated region
        $region17: #{tpu_custom_call.1} parent=11 // pred_check
          %p279 = pneg %p120
        $region18: #{tpu_custom_call.1} parent=11 // pred_check_branch
          %281 = sbr.rel (%p279) target = $region20
        $region19: #{tpu_custom_call.1} parent=11 // pred_region
          %s283 = ssub.s32 7680, 7680
          %284 = vsyncadd [#allocation9], %s283
          %s285 = sshll.u32 [#allocation8], 4
          %s286 = int_to_ptr.vmem [resolvable:$true] %s285
          %291 = dma.hbm_to_vmem [thread:$0]  %s3, 7680, %s286, [#allocation9], 512, 512, 32
        $region20: #{tpu_custom_call.1} parent=11 // pred_fallthru
          _
        // Predicated region
        $region21: #{tpu_custom_call.1} parent=11 // pred_check
          %p292 = pneg %p141
        $region22: #{tpu_custom_call.1} parent=11 // pred_check_branch
          %294 = sbr.rel (%p292) target = $region24
        $region23: #{tpu_custom_call.1} parent=11 // pred_region
          %s296 = ssub.s32 3840, 3840
          %297 = vsyncadd [#allocation9], %s296
          %s298 = sshll.u32 [#allocation10], 4
          %s299 = int_to_ptr.vmem [resolvable:$true] %s298
          %304 = dma.hbm_to_vmem [thread:$0]  %s4, 3840, %s299, [#allocation9], 256, 256, 16
        $region24: #{tpu_custom_call.1} parent=11 // pred_fallthru
          _
        // Predicated region
        $region25: #{tpu_custom_call.1} parent=11 // pred_check
          %p305 = pneg %p162
        $region26: #{tpu_custom_call.1} parent=11 // pred_check_branch
          %307 = sbr.rel (%p305) target = $region28
        $region27: #{tpu_custom_call.1} parent=11 // pred_region
          %s309 = ssub.s32 3072, 3072
          %310 = vsyncadd [#allocation12], %s309
          %s311 = sshll.u32 [#allocation11], 4
          %s312 = int_to_ptr.vmem [resolvable:$true] %s311
          %317 = dma.hbm_to_vmem [thread:$0]  %s5, 3072, %s312, [#allocation12], 256, 256, 16
        $region28: #{tpu_custom_call.1} parent=11 // pred_fallthru
          _
        // Predicated region
        $region29: #{tpu_custom_call.1} parent=11 // pred_check
          %p318 = pneg %p183
        $region30: #{tpu_custom_call.1} parent=11 // pred_check_branch
          %320 = sbr.rel (%p318) target = $region32
        $region31: #{tpu_custom_call.1} parent=11 // pred_region
          _
        $region32: #{tpu_custom_call.1} parent=11 // pred_fallthru
          _
        // Predicated region
        $region33: #{tpu_custom_call.1} parent=11 // pred_check
          %p321 = pneg %p204
        $region34: #{tpu_custom_call.1} parent=11 // pred_check_branch
          %323 = sbr.rel (%p321) target = $region36
        $region35: #{tpu_custom_call.1} parent=11 // pred_region
          _
        $region36: #{tpu_custom_call.1} parent=11 // pred_fallthru
          _
        // Predicated region
        $region37: #{tpu_custom_call.1} parent=11 // pred_check
          %p324 = pneg %p225
        $region38: #{tpu_custom_call.1} parent=11 // pred_check_branch
          %326 = sbr.rel (%p324) target = $region40
        $region39: #{tpu_custom_call.1} parent=11 // pred_region
          _
        $region40: #{tpu_custom_call.1} parent=11 // pred_fallthru
          _
      $region12: #{tpu_custom_call.1} parent=5 // pred_fallthru
        _
      %p327 = scmp.lt.s32.totalorder %s26, 2
      // Predicated region
      $region41: #{tpu_custom_call.1} parent=5 // pred_check
        %p328 = pneg %p327
      $region42: #{tpu_custom_call.1} parent=5 // pred_check_branch
        %330 = sbr.rel (%p328) target = $region44
      $region43: #{tpu_custom_call.1} parent=5 // pred_region
        // Predicated region
        $region45: #{tpu_custom_call.1} parent=43 // pred_check
          %p331 = pneg %p46
        $region46: #{tpu_custom_call.1} parent=43 // pred_check_branch
          %333 = sbr.rel (%p331) target = $region48
        $region47: #{tpu_custom_call.1} parent=43 // pred_region
          %s334 = sand.u32 %s36, 1
          %s335 = scalar_lea.sflag [#allocation3], %s334
          %s336 = sand.u32 %s36, 1
          %s337 = smul.addr %s336, 16
          %s338 = scalar_lea.vmem [#allocation2], %s337
          %s339 = smul.u32 2, %s26
          %s341 = ssub.s32 256, 256
          %342 = vsyncadd %s335, %s341
          %s343 = smul.addr %s339, 128
          %s344 = scalar_lea.hbm %s0, %s343
          %s345 = sshll.u32 %s338, 4
          %s346 = int_to_ptr.vmem [resolvable:$true] %s345
          %351 = dma.hbm_to_vmem [thread:$0]  %s344, 256, %s346, %s335, 128, 128, 8
        $region48: #{tpu_custom_call.1} parent=43 // pred_fallthru
          _
        // Predicated region
        $region49: #{tpu_custom_call.1} parent=43 // pred_check
          %p352 = pneg %p72
        $region50: #{tpu_custom_call.1} parent=43 // pred_check_branch
          %354 = sbr.rel (%p352) target = $region52
        $region51: #{tpu_custom_call.1} parent=43 // pred_region
          %s355 = sand.u32 %s26, 1
          %s356 = scalar_lea.sflag [#allocation6], %s355
          %s357 = sand.u32 %s62, 1
          %s358 = smul.addr %s357, 16
          %s359 = scalar_lea.vmem [#allocation5], %s358
          %s360 = smul.u32 2, %s26
          %s362 = ssub.s32 256, 256
          %363 = vsyncadd %s356, %s362
          %s364 = smul.addr %s360, 128
          %s365 = scalar_lea.hbm %s1, %s364
          %s366 = sshll.u32 %s359, 4
          %s367 = int_to_ptr.vmem [resolvable:$true] %s366
          %372 = dma.hbm_to_vmem [thread:$0]  %s365, 256, %s367, %s356, 128, 128, 8
        $region52: #{tpu_custom_call.1} parent=43 // pred_fallthru
          _
      $region44: #{tpu_custom_call.1} parent=5 // pred_fallthru
        _
      %p373 = scmp.le.s32.totalorder 1, %s26
      %p374 = scmp.lt.s32.totalorder %s26, 3
      %p375 = pnand %p373, %p374
      %p376 = pneg %p375
      // Predicated region
      $region53: #{tpu_custom_call.1} parent=5 // pred_check
        _
      $region54: #{tpu_custom_call.1} parent=5 // pred_check_branch
        %378 = sbr.rel (%p375) target = $region56
      $region55: #{tpu_custom_call.1} parent=5 // pred_region
        %s379 = ssub.s32 %s26, 1
        %s380 = sand.u32 %s39, 1
        %s381 = scalar_lea.sflag [#allocation3], %s380
        %s382 = sand.u32 %s39, 1
        %s383 = smul.addr %s382, 16
        %s384 = scalar_lea.vmem [#allocation2], %s383
        // Predicated region
        $region57: #{tpu_custom_call.1} parent=55 // pred_check
          %p385 = pneg %p52
        $region58: #{tpu_custom_call.1} parent=55 // pred_check_branch
          %387 = sbr.rel (%p385) target = $region60
        $region59: #{tpu_custom_call.1} parent=55 // pred_region
          %388 = dma.done %s381, 256
        $region60: #{tpu_custom_call.1} parent=55 // pred_fallthru
          _
        %s389 = sand.u32 %s31, 1
        %s390 = scalar_lea.sflag [#allocation6], %s389
        %s391 = sand.u32 %s65, 1
        %s392 = smul.addr %s391, 16
        %s393 = scalar_lea.vmem [#allocation5], %s392
        // Predicated region
        $region61: #{tpu_custom_call.1} parent=55 // pred_check
          %p394 = pneg %p78
        $region62: #{tpu_custom_call.1} parent=55 // pred_check_branch
          %396 = sbr.rel (%p394) target = $region64
        $region63: #{tpu_custom_call.1} parent=55 // pred_region
          %397 = dma.done %s390, 256
        $region64: #{tpu_custom_call.1} parent=55 // pred_fallthru
          _
        // Predicated region
        $region65: #{tpu_custom_call.1} parent=55 // pred_check
          %p398 = pneg %p99
        $region66: #{tpu_custom_call.1} parent=55 // pred_check_branch
          %400 = sbr.rel (%p398) target = $region68
        $region67: #{tpu_custom_call.1} parent=55 // pred_region
          %401 = dma.done [#allocation6], 512
        $region68: #{tpu_custom_call.1} parent=55 // pred_fallthru
          _
        // Predicated region
        $region69: #{tpu_custom_call.1} parent=55 // pred_check
          %p402 = pneg %p120
        $region70: #{tpu_custom_call.1} parent=55 // pred_check_branch
          %404 = sbr.rel (%p402) target = $region72
        $region71: #{tpu_custom_call.1} parent=55 // pred_region
          %405 = dma.done [#allocation9], 7680
        $region72: #{tpu_custom_call.1} parent=55 // pred_fallthru
          _
        // Predicated region
        $region73: #{tpu_custom_call.1} parent=55 // pred_check
          %p406 = pneg %p141
        $region74: #{tpu_custom_call.1} parent=55 // pred_check_branch
          %408 = sbr.rel (%p406) target = $region76
        $region75: #{tpu_custom_call.1} parent=55 // pred_region
          %409 = dma.done [#allocation9], 3840
        $region76: #{tpu_custom_call.1} parent=55 // pred_fallthru
          _
        // Predicated region
        $region77: #{tpu_custom_call.1} parent=55 // pred_check
          %p410 = pneg %p162
        $region78: #{tpu_custom_call.1} parent=55 // pred_check_branch
          %412 = sbr.rel (%p410) target = $region80
        $region79: #{tpu_custom_call.1} parent=55 // pred_region
          %413 = dma.done [#allocation12], 3072
        $region80: #{tpu_custom_call.1} parent=55 // pred_fallthru
          _
        %s414 = sand.u32 %s39, 1
        %s415 = scalar_lea.sflag [#allocation3], %s414
        %s416 = sand.u32 %s39, 1
        %s417 = smul.addr %s416, 16
        %s418 = scalar_lea.vmem [#allocation2], %s417
        %p419 = pneg %p52
        %p420 = pneg %p49
        %s421 = sand.u32 %s31, 1
        %s422 = scalar_lea.sflag [#allocation6], %s421
        %s423 = sand.u32 %s65, 1
        %s424 = smul.addr %s423, 16
        %s425 = scalar_lea.vmem [#allocation5], %s424
        %p426 = pneg %p78
        %p427 = pneg %p75
        %p428 = pneg %p99
        %p429 = pneg %p96
        %p430 = pneg %p120
        %p431 = pneg %p117
        %p432 = pneg %p141
        %p433 = pneg %p138
        %p434 = pneg %p162
        %p435 = pneg %p159
        %p436 = pneg %p183
        %p437 = pneg %p180
        %p438 = pneg %p204
        %p439 = pneg %p201
        %p440 = pneg %p225
        %p441 = pneg %p222
        %p442 = pneg %p251
        %p443 = pneg %p248
        %s444 = sand.u32 %s238, 1
        %s445 = scalar_lea.sflag [#allocation4], %s444
        %s446 = sand.u32 %s238, 1
        %s447 = smul.addr %s446, 16
        %s448 = scalar_lea.vmem [#allocation13], %s447
        %s449 = smul.u32 2, %s31
        %s450 = smul.u32 2, %s31
        %s451 = smul.u32 2, %s31
        %v452 = vld [vmem:[%s384] sm:$0xff]
        %v453 = vld [vmem:[%s384 + $0x8] sm:$0xff]
        %v454 = vld [vmem:[%s393] sm:$0xff]
        %v455 = vld [vmem:[%s393 + $0x8] sm:$0xff]
        %v456 = vld [vmem:[%s6] sm:$0xff]
        %v457 = vld [vmem:[%s6 + $0x8] sm:$0xff]
        %v458 = vld [vmem:[#allocation8] sm:$0xff]
        %v459 = vld [vmem:[#allocation8 + $0x8] sm:$0xff]
        %v460 = vld [vmem:[#allocation8 + $0x10] sm:$0xff]
        %v461 = vld [vmem:[#allocation8 + $0x18] sm:$0xff]
        %v462 = vld [vmem:[#allocation8 + $0x20] sm:$0xff]
        %v463 = vld [vmem:[#allocation8 + $0x28] sm:$0xff]
        %v464 = vld [vmem:[#allocation8 + $0x30] sm:$0xff]
        %v465 = vld [vmem:[#allocation8 + $0x38] sm:$0xff]
        %v466 = vld [vmem:[#allocation8 + $0x40] sm:$0xff]
        %v467 = vld [vmem:[#allocation8 + $0x48] sm:$0xff]
        %v468 = vld [vmem:[#allocation8 + $0x50] sm:$0xff]
        %v469 = vld [vmem:[#allocation8 + $0x58] sm:$0xff]
        %v470 = vld [vmem:[#allocation8 + $0x60] sm:$0xff]
        %v471 = vld [vmem:[#allocation8 + $0x68] sm:$0xff]
        %v472 = vld [vmem:[#allocation8 + $0x70] sm:$0xff]
        %v473 = vld [vmem:[#allocation8 + $0x78] sm:$0xff]
        %v474 = vld [vmem:[#allocation8 + $0x80] sm:$0xf]
        %v475 = vld [vmem:[#allocation8 + $0x88] sm:$0xf]
        %v476 = vld [vmem:[#allocation8 + $0x90] sm:$0xf]
        %v477 = vld [vmem:[#allocation8 + $0x98] sm:$0xf]
        %v478 = vld [vmem:[#allocation7] sm:$0xff]
        %v479 = vld [vmem:[#allocation7 + $0x8] sm:$0xff]
        %vm480 = vcmask 130048
        %v482 = vsel %vm480, %v478, 0
        %v485 = vsel %vm480, %v479, 0
        %487 = vmatprep.subr.mxu0 0.0
        %488 = vmatpush1.msra.mxu0 %v452
        %489 = vmatprep.subr.mxu0 0.0
        %490 = vmatpush1.msra.mxu0 %v453
        %491 = vmatprep.subr.mxu0 0.0
        %492 = vmatpush1.msra.mxu0 0.0
        %493 = vmatprep.subr.mxu0 0.0
        %494 = vmatpush1.msra.mxu0 0.0
        %495 = vmatprep.subr.mxu0 0.0
        %496 = vmatpush1.msra.mxu0 0.0
        %497 = vmatprep.subr.mxu0 0.0
        %498 = vmatpush1.msra.mxu0 0.0
        %499 = vmatprep.subr.mxu0 0.0
        %500 = vmatpush1.msra.mxu0 0.0
        %501 = vmatprep.subr.mxu0 0.0
        %502 = vmatpush1.msra.mxu0 0.0
        %503 = vmatprep.subr.mxu0 0.0
        %504 = vmatpush1.msra.mxu0 0.0
        %505 = vmatprep.subr.mxu0 0.0
        %506 = vmatpush1.msra.mxu0 0.0
        %507 = vmatprep.subr.mxu0 0.0
        %508 = vmatpush1.msra.mxu0 0.0
        %509 = vmatprep.subr.mxu0 0.0
        %510 = vmatpush1.msra.mxu0 0.0
        %511 = vmatprep.subr.mxu0 0.0
        %512 = vmatpush1.msra.mxu0 0.0
        %513 = vmatprep.subr.mxu0 0.0
        %514 = vmatpush1.msra.mxu0 0.0
        %515 = vmatprep.subr.mxu0 0.0
        %516 = vmatpush1.msra.mxu0 0.0
        %517 = vmatprep.subr.mxu0 0.0
        %518 = vmatpush1.msra.mxu0 0.0
        %519 = vmatprep.subr.mxu0 0.0
        %520 = vmatpush1.msra.mxu0 0.0
        %521 = vmatprep.subr.mxu0 0.0
        %522 = vmatpush1.msra.mxu0 0.0
        %523 = vmatprep.subr.mxu0 0.0
        %524 = vmatpush1.msra.mxu0 0.0
        %525 = vmatprep.subr.mxu0 0.0
        %526 = vmatpush1.msra.mxu0 0.0
        %527 = vmatprep.subr.mxu0 0.0
        %528 = vmatpush1.msra.mxu0 0.0
        %529 = vmatprep.subr.mxu0 0.0
        %530 = vmatpush1.msra.mxu0 0.0
        %531 = vmatprep.subr.mxu0 0.0
        %532 = vmatpush1.msra.mxu0 0.0
        %533 = vmatprep.subr.mxu0 0.0
        %534 = vmatpush1.msra.mxu0 0.0
        %535 = vmatprep.subr.mxu0 0.0
        %536 = vmatpush1.msra.mxu0 0.0
        %537 = vmatprep.subr.mxu0 0.0
        %538 = vmatpush1.msra.mxu0 0.0
        %539 = vmatprep.subr.mxu0 0.0
        %540 = vmatpush1.msra.mxu0 0.0
        %541 = vmatprep.subr.mxu0 0.0
        %542 = vmatpush1.msra.mxu0 0.0
        %543 = vmatprep.subr.mxu0 0.0
        %544 = vmatpush1.msra.mxu0 0.0
        %545 = vmatprep.subr.mxu0 0.0
        %546 = vmatpush1.msra.mxu0 0.0
        %547 = vmatprep.subr.mxu0 0.0
        %548 = vmatpush1.msra.mxu0 0.0
        %549 = vmatprep.subr.mxu0 0.0
        %550 = vmatpush1.msra.mxu0 0.0
        %551 = vmatprep.mubr.f32.mxu0 0.0
        %552 = vmatmul.mubr.f32.gmra.mrb[0].mxu0 %v482
        %v553 = vpop.f32.mrb[0].mxu0
        %v554 = vadd.f32 0.0, %v553
        %v555 = vpop.f32.mrb[0].mxu0
        %556 = vmatprep.mubr.f32.mxu0 0.0
        %557 = vmatmul.mubr.f32.gmra.mrb[0].mxu0 %v485
        %v558 = vpop.f32.mrb[0].mxu0
        %v559 = vadd.f32 0.0, %v558
        %v560 = vpop.f32.mrb[0].mxu0
        %561 = vdwg.mxu0
        %s562 = scalar_lea.vmem [#allocation8], 160
        %v563 = vld [vmem:[%s562] sm:$0xff]
        %v564 = vld [vmem:[%s562 + $0x8] sm:$0xff]
        %v565 = vld [vmem:[%s562 + $0x10] sm:$0xff]
        %v566 = vld [vmem:[%s562 + $0x18] sm:$0xff]
        %v567 = vld [vmem:[%s562 + $0x20] sm:$0xff]
        %v568 = vld [vmem:[%s562 + $0x28] sm:$0xff]
        %v569 = vld [vmem:[%s562 + $0x30] sm:$0xff]
        %v570 = vld [vmem:[%s562 + $0x38] sm:$0xff]
        %v571 = vld [vmem:[%s562 + $0x40] sm:$0xff]
        %v572 = vld [vmem:[%s562 + $0x48] sm:$0xff]
        %v573 = vld [vmem:[%s562 + $0x50] sm:$0xff]
        %v574 = vld [vmem:[%s562 + $0x58] sm:$0xff]
        %v575 = vld [vmem:[%s562 + $0x60] sm:$0xff]
        %v576 = vld [vmem:[%s562 + $0x68] sm:$0xff]
        %v577 = vld [vmem:[%s562 + $0x70] sm:$0xff]
        %v578 = vld [vmem:[%s562 + $0x78] sm:$0xff]
        %v579 = vld [vmem:[%s562 + $0x80] sm:$0xf]
        %v580 = vld [vmem:[%s562 + $0x88] sm:$0xf]
        %v581 = vld [vmem:[%s562 + $0x90] sm:$0xf]
        %v582 = vld [vmem:[%s562 + $0x98] sm:$0xf]
        %vm583 = vcmask 293888
        %v585 = vsel %vm583, %v554, 0
        %v588 = vsel %vm583, %v559, 0
        %vm590 = vcmask 1043456
        %v592 = vsel %vm590, %v579, 0
        %v595 = vsel %vm590, %v580, 0
        %v598 = vsel %vm590, %v581, 0
        %v601 = vsel %vm590, %v582, 0
        %603 = vmatprep.subr.mxu0 %v564
        %604 = vmatpush1.msra.mxu0 %v563
        %605 = vmatprep.subr.mxu0 %v568
        %606 = vmatpush1.msra.mxu0 %v567
        %607 = vmatprep.subr.mxu0 %v572
        %608 = vmatpush1.msra.mxu0 %v571
        %609 = vmatprep.subr.mxu0 %v576
        %610 = vmatpush1.msra.mxu0 %v575
        %611 = vmatprep.subr.mxu0 %v595
        %612 = vmatpush1.msra.mxu0 %v592
        %613 = vmatprep.subr.mxu0 0.0
        %614 = vmatpush1.msra.mxu0 0.0
        %615 = vmatprep.subr.mxu0 0.0
        %616 = vmatpush1.msra.mxu0 0.0
        %617 = vmatprep.subr.mxu0 0.0
        %618 = vmatpush1.msra.mxu0 0.0
        %619 = vmatprep.subr.mxu0 0.0
        %620 = vmatpush1.msra.mxu0 0.0
        %621 = vmatprep.subr.mxu0 0.0
        %622 = vmatpush1.msra.mxu0 0.0
        %623 = vmatprep.subr.mxu0 0.0
        %624 = vmatpush1.msra.mxu0 0.0
        %625 = vmatprep.subr.mxu0 0.0
        %626 = vmatpush1.msra.mxu0 0.0
        %627 = vmatprep.subr.mxu0 0.0
        %628 = vmatpush1.msra.mxu0 0.0
        %629 = vmatprep.subr.mxu0 0.0
        %630 = vmatpush1.msra.mxu0 0.0
        %631 = vmatprep.subr.mxu0 0.0
        %632 = vmatpush1.msra.mxu0 0.0
        %633 = vmatprep.subr.mxu0 0.0
        %634 = vmatpush1.msra.mxu0 0.0
        %635 = vmatprep.subr.mxu0 0.0
        %636 = vmatpush1.msra.mxu0 0.0
        %637 = vmatprep.subr.mxu0 0.0
        %638 = vmatpush1.msra.mxu0 0.0
        %639 = vmatprep.subr.mxu0 0.0
        %640 = vmatpush1.msra.mxu0 0.0
        %641 = vmatprep.subr.mxu0 0.0
        %642 = vmatpush1.msra.mxu0 0.0
        %643 = vmatprep.subr.mxu0 0.0
        %644 = vmatpush1.msra.mxu0 0.0
        %645 = vmatprep.subr.mxu0 0.0
        %646 = vmatpush1.msra.mxu0 0.0
        %647 = vmatprep.subr.mxu0 0.0
        %648 = vmatpush1.msra.mxu0 0.0
        %649 = vmatprep.subr.mxu0 0.0
        %650 = vmatpush1.msra.mxu0 0.0
        %651 = vmatprep.subr.mxu0 0.0
        %652 = vmatpush1.msra.mxu0 0.0
        %653 = vmatprep.subr.mxu0 0.0
        %654 = vmatpush1.msra.mxu0 0.0
        %655 = vmatprep.subr.mxu0 0.0
        %656 = vmatpush1.msra.mxu0 0.0
        %657 = vmatprep.subr.mxu0 0.0
        %658 = vmatpush1.msra.mxu0 0.0
        %659 = vmatprep.subr.mxu0 0.0
        %660 = vmatpush1.msra.mxu0 0.0
        %661 = vmatprep.subr.mxu0 0.0
        %662 = vmatpush1.msra.mxu0 0.0
        %663 = vmatprep.subr.mxu0 0.0
        %664 = vmatpush1.msra.mxu0 0.0
        %665 = vmatprep.subr.mxu0 0.0
        %666 = vmatpush1.msra.mxu0 0.0
        %667 = vmatprep.mubr.f32.mxu0 0.0
        %668 = vmatmul.mubr.f32.gmra.mrb[0].mxu0 %v585
        %v669 = vpop.f32.mrb[0].mxu0
        %v670 = vadd.f32 0.0, %v669
        %v671 = vpop.f32.mrb[0].mxu0
        %v672 = vadd.f32 0.0, %v671
        %673 = vmatprep.mubr.f32.mxu0 0.0
        %674 = vmatmul.mubr.f32.gmra.mrb[0].mxu0 %v588
        %v675 = vpop.f32.mrb[0].mxu0
        %v676 = vadd.f32 0.0, %v675
        %v677 = vpop.f32.mrb[0].mxu0
        %v678 = vadd.f32 0.0, %v677
        %679 = vdwg.mxu0
        %680 = vmatprep.subr.mxu0 %v566
        %681 = vmatpush1.msra.mxu0 %v565
        %682 = vmatprep.subr.mxu0 %v570
        %683 = vmatpush1.msra.mxu0 %v569
        %684 = vmatprep.subr.mxu0 %v574
        %685 = vmatpush1.msra.mxu0 %v573
        %686 = vmatprep.subr.mxu0 %v578
        %687 = vmatpush1.msra.mxu0 %v577
        %688 = vmatprep.subr.mxu0 %v601
        %689 = vmatpush1.msra.mxu0 %v598
        %690 = vmatprep.subr.mxu0 0.0
        %691 = vmatpush1.msra.mxu0 0.0
        %692 = vmatprep.subr.mxu0 0.0
        %693 = vmatpush1.msra.mxu0 0.0
        %694 = vmatprep.subr.mxu0 0.0
        %695 = vmatpush1.msra.mxu0 0.0
        %696 = vmatprep.subr.mxu0 0.0
        %697 = vmatpush1.msra.mxu0 0.0
        %698 = vmatprep.subr.mxu0 0.0
        %699 = vmatpush1.msra.mxu0 0.0
        %700 = vmatprep.subr.mxu0 0.0
        %701 = vmatpush1.msra.mxu0 0.0
        %702 = vmatprep.subr.mxu0 0.0
        %703 = vmatpush1.msra.mxu0 0.0
        %704 = vmatprep.subr.mxu0 0.0
        %705 = vmatpush1.msra.mxu0 0.0
        %706 = vmatprep.subr.mxu0 0.0
        %707 = vmatpush1.msra.mxu0 0.0
        %708 = vmatprep.subr.mxu0 0.0
        %709 = vmatpush1.msra.mxu0 0.0
        %710 = vmatprep.subr.mxu0 0.0
        %711 = vmatpush1.msra.mxu0 0.0
        %712 = vmatprep.subr.mxu0 0.0
        %713 = vmatpush1.msra.mxu0 0.0
        %714 = vmatprep.subr.mxu0 0.0
        %715 = vmatpush1.msra.mxu0 0.0
        %716 = vmatprep.subr.mxu0 0.0
        %717 = vmatpush1.msra.mxu0 0.0
        %718 = vmatprep.subr.mxu0 0.0
        %719 = vmatpush1.msra.mxu0 0.0
        %720 = vmatprep.subr.mxu0 0.0
        %721 = vmatpush1.msra.mxu0 0.0
        %722 = vmatprep.subr.mxu0 0.0
        %723 = vmatpush1.msra.mxu0 0.0
        %724 = vmatprep.subr.mxu0 0.0
        %725 = vmatpush1.msra.mxu0 0.0
        %726 = vmatprep.subr.mxu0 0.0
        %727 = vmatpush1.msra.mxu0 0.0
        %728 = vmatprep.subr.mxu0 0.0
        %729 = vmatpush1.msra.mxu0 0.0
        %730 = vmatprep.subr.mxu0 0.0
        %731 = vmatpush1.msra.mxu0 0.0
        %732 = vmatprep.subr.mxu0 0.0
        %733 = vmatpush1.msra.mxu0 0.0
        %734 = vmatprep.subr.mxu0 0.0
        %735 = vmatpush1.msra.mxu0 0.0
        %736 = vmatprep.subr.mxu0 0.0
        %737 = vmatpush1.msra.mxu0 0.0
        %738 = vmatprep.subr.mxu0 0.0
        %739 = vmatpush1.msra.mxu0 0.0
        %740 = vmatprep.subr.mxu0 0.0
        %741 = vmatpush1.msra.mxu0 0.0
        %742 = vmatprep.subr.mxu0 0.0
        %743 = vmatpush1.msra.mxu0 0.0
        %744 = vmatprep.mubr.f32.mxu0 0.0
        %745 = vmatmul.mubr.f32.gmra.mrb[0].mxu0 %v585
        %v746 = vpop.f32.mrb[0].mxu0
        %v747 = vadd.f32 0.0, %v746
        %v748 = vpop.f32.mrb[0].mxu0
        %v749 = vadd.f32 0.0, %v748
        %750 = vmatprep.mubr.f32.mxu0 0.0
        %751 = vmatmul.mubr.f32.gmra.mrb[0].mxu0 %v588
        %v752 = vpop.f32.mrb[0].mxu0
        %v753 = vadd.f32 0.0, %v752
        %v754 = vpop.f32.mrb[0].mxu0
        %v755 = vadd.f32 0.0, %v754
        %756 = vdwg.mxu0
        %v758 = vsel %vm583, %v452, 0
        %v761 = vsel %vm583, %v453, 0
        %v764 = vsel %vm590, %v474, 0
        %v767 = vsel %vm590, %v475, 0
        %v770 = vsel %vm590, %v476, 0
        %v773 = vsel %vm590, %v477, 0
        %775 = vmatprep.subr.mxu0 %v459
        %776 = vmatpush1.msra.mxu0 %v458
        %777 = vmatprep.subr.mxu0 %v463
        %778 = vmatpush1.msra.mxu0 %v462
        %779 = vmatprep.subr.mxu0 %v467
        %780 = vmatpush1.msra.mxu0 %v466
        %781 = vmatprep.subr.mxu0 %v471
        %782 = vmatpush1.msra.mxu0 %v470
        %783 = vmatprep.subr.mxu0 %v767
        %784 = vmatpush1.msra.mxu0 %v764
        %785 = vmatprep.subr.mxu0 0.0
        %786 = vmatpush1.msra.mxu0 0.0
        %787 = vmatprep.subr.mxu0 0.0
        %788 = vmatpush1.msra.mxu0 0.0
        %789 = vmatprep.subr.mxu0 0.0
        %790 = vmatpush1.msra.mxu0 0.0
        %791 = vmatprep.subr.mxu0 0.0
        %792 = vmatpush1.msra.mxu0 0.0
        %793 = vmatprep.subr.mxu0 0.0
        %794 = vmatpush1.msra.mxu0 0.0
        %795 = vmatprep.subr.mxu0 0.0
        %796 = vmatpush1.msra.mxu0 0.0
        %797 = vmatprep.subr.mxu0 0.0
        %798 = vmatpush1.msra.mxu0 0.0
        %799 = vmatprep.subr.mxu0 0.0
        %800 = vmatpush1.msra.mxu0 0.0
        %801 = vmatprep.subr.mxu0 0.0
        %802 = vmatpush1.msra.mxu0 0.0
        %803 = vmatprep.subr.mxu0 0.0
        %804 = vmatpush1.msra.mxu0 0.0
        %805 = vmatprep.subr.mxu0 0.0
        %806 = vmatpush1.msra.mxu0 0.0
        %807 = vmatprep.subr.mxu0 0.0
        %808 = vmatpush1.msra.mxu0 0.0
        %809 = vmatprep.subr.mxu0 0.0
        %810 = vmatpush1.msra.mxu0 0.0
        %811 = vmatprep.subr.mxu0 0.0
        %812 = vmatpush1.msra.mxu0 0.0
        %813 = vmatprep.subr.mxu0 0.0
        %814 = vmatpush1.msra.mxu0 0.0
        %815 = vmatprep.subr.mxu0 0.0
        %816 = vmatpush1.msra.mxu0 0.0
        %817 = vmatprep.subr.mxu0 0.0
        %818 = vmatpush1.msra.mxu0 0.0
        %819 = vmatprep.subr.mxu0 0.0
        %820 = vmatpush1.msra.mxu0 0.0
        %821 = vmatprep.subr.mxu0 0.0
        %822 = vmatpush1.msra.mxu0 0.0
        %823 = vmatprep.subr.mxu0 0.0
        %824 = vmatpush1.msra.mxu0 0.0
        %825 = vmatprep.subr.mxu0 0.0
        %826 = vmatpush1.msra.mxu0 0.0
        %827 = vmatprep.subr.mxu0 0.0
        %828 = vmatpush1.msra.mxu0 0.0
        %829 = vmatprep.subr.mxu0 0.0
        %830 = vmatpush1.msra.mxu0 0.0
        %831 = vmatprep.subr.mxu0 0.0
        %832 = vmatpush1.msra.mxu0 0.0
        %833 = vmatprep.subr.mxu0 0.0
        %834 = vmatpush1.msra.mxu0 0.0
        %835 = vmatprep.subr.mxu0 0.0
        %836 = vmatpush1.msra.mxu0 0.0
        %837 = vmatprep.subr.mxu0 0.0
        %838 = vmatpush1.msra.mxu0 0.0
        %839 = vmatprep.mubr.f32.mxu0 0.0
        %840 = vmatmul.mubr.f32.gmra.mrb[0].mxu0 %v758
        %v841 = vpop.f32.mrb[0].mxu0
        %v842 = vadd.f32 %v670, %v841
        %v843 = vpop.f32.mrb[0].mxu0
        %v844 = vadd.f32 %v672, %v843
        %845 = vmatprep.mubr.f32.mxu0 0.0
        %846 = vmatmul.mubr.f32.gmra.mrb[0].mxu0 %v761
        %v847 = vpop.f32.mrb[0].mxu0
        %v848 = vadd.f32 %v676, %v847
        %v849 = vpop.f32.mrb[0].mxu0
        %v850 = vadd.f32 %v678, %v849
        %851 = vdwg.mxu0
        %852 = vmatprep.subr.mxu0 %v461
        %853 = vmatpush1.msra.mxu0 %v460
        %854 = vmatprep.subr.mxu0 %v465
        %855 = vmatpush1.msra.mxu0 %v464
        %856 = vmatprep.subr.mxu0 %v469
        %857 = vmatpush1.msra.mxu0 %v468
        %858 = vmatprep.subr.mxu0 %v473
        %859 = vmatpush1.msra.mxu0 %v472
        %860 = vmatprep.subr.mxu0 %v773
        %861 = vmatpush1.msra.mxu0 %v770
        %862 = vmatprep.subr.mxu0 0.0
        %863 = vmatpush1.msra.mxu0 0.0
        %864 = vmatprep.subr.mxu0 0.0
        %865 = vmatpush1.msra.mxu0 0.0
        %866 = vmatprep.subr.mxu0 0.0
        %867 = vmatpush1.msra.mxu0 0.0
        %868 = vmatprep.subr.mxu0 0.0
        %869 = vmatpush1.msra.mxu0 0.0
        %870 = vmatprep.subr.mxu0 0.0
        %871 = vmatpush1.msra.mxu0 0.0
        %872 = vmatprep.subr.mxu0 0.0
        %873 = vmatpush1.msra.mxu0 0.0
        %874 = vmatprep.subr.mxu0 0.0
        %875 = vmatpush1.msra.mxu0 0.0
        %876 = vmatprep.subr.mxu0 0.0
        %877 = vmatpush1.msra.mxu0 0.0
        %878 = vmatprep.subr.mxu0 0.0
        %879 = vmatpush1.msra.mxu0 0.0
        %880 = vmatprep.subr.mxu0 0.0
        %881 = vmatpush1.msra.mxu0 0.0
        %882 = vmatprep.subr.mxu0 0.0
        %883 = vmatpush1.msra.mxu0 0.0
        %884 = vmatprep.subr.mxu0 0.0
        %885 = vmatpush1.msra.mxu0 0.0
        %886 = vmatprep.subr.mxu0 0.0
        %887 = vmatpush1.msra.mxu0 0.0
        %888 = vmatprep.subr.mxu0 0.0
        %889 = vmatpush1.msra.mxu0 0.0
        %890 = vmatprep.subr.mxu0 0.0
        %891 = vmatpush1.msra.mxu0 0.0
        %892 = vmatprep.subr.mxu0 0.0
        %893 = vmatpush1.msra.mxu0 0.0
        %894 = vmatprep.subr.mxu0 0.0
        %895 = vmatpush1.msra.mxu0 0.0
        %896 = vmatprep.subr.mxu0 0.0
        %897 = vmatpush1.msra.mxu0 0.0
        %898 = vmatprep.subr.mxu0 0.0
        %899 = vmatpush1.msra.mxu0 0.0
        %900 = vmatprep.subr.mxu0 0.0
        %901 = vmatpush1.msra.mxu0 0.0
        %902 = vmatprep.subr.mxu0 0.0
        %903 = vmatpush1.msra.mxu0 0.0
        %904 = vmatprep.subr.mxu0 0.0
        %905 = vmatpush1.msra.mxu0 0.0
        %906 = vmatprep.subr.mxu0 0.0
        %907 = vmatpush1.msra.mxu0 0.0
        %908 = vmatprep.subr.mxu0 0.0
        %909 = vmatpush1.msra.mxu0 0.0
        %910 = vmatprep.subr.mxu0 0.0
        %911 = vmatpush1.msra.mxu0 0.0
        %912 = vmatprep.subr.mxu0 0.0
        %913 = vmatpush1.msra.mxu0 0.0
        %914 = vmatprep.subr.mxu0 0.0
        %915 = vmatpush1.msra.mxu0 0.0
        %916 = vmatprep.mubr.f32.mxu0 0.0
        %917 = vmatmul.mubr.f32.gmra.mrb[0].mxu0 %v758
        %v918 = vpop.f32.mrb[0].mxu0
        %v919 = vadd.f32 %v747, %v918
        %v920 = vpop.f32.mrb[0].mxu0
        %v921 = vadd.f32 %v749, %v920
        %922 = vmatprep.mubr.f32.mxu0 0.0
        %923 = vmatmul.mubr.f32.gmra.mrb[0].mxu0 %v761
        %v924 = vpop.f32.mrb[0].mxu0
        %v925 = vadd.f32 %v753, %v924
        %v926 = vpop.f32.mrb[0].mxu0
        %v927 = vadd.f32 %v755, %v926
        %928 = vdwg.mxu0
        %s929 = scalar_lea.vmem [#allocation7], 16
        %v930 = vld [vmem:[%s929] sm:$0xff]
        %v931 = vld [vmem:[%s929 + $0x8] sm:$0xff]
        %v933 = vsel %vm480, %v930, 0
        %v936 = vsel %vm480, %v931, 0
        %938 = vmatprep.subr.mxu0 0.0
        %939 = vmatpush1.msra.mxu0 %v452
        %940 = vmatprep.subr.mxu0 0.0
        %941 = vmatpush1.msra.mxu0 %v453
        %942 = vmatprep.subr.mxu0 0.0
        %943 = vmatpush1.msra.mxu0 0.0
        %944 = vmatprep.subr.mxu0 0.0
        %945 = vmatpush1.msra.mxu0 0.0
        %946 = vmatprep.subr.mxu0 0.0
        %947 = vmatpush1.msra.mxu0 0.0
        %948 = vmatprep.subr.mxu0 0.0
        %949 = vmatpush1.msra.mxu0 0.0
        %950 = vmatprep.subr.mxu0 0.0
        %951 = vmatpush1.msra.mxu0 0.0
        %952 = vmatprep.subr.mxu0 0.0
        %953 = vmatpush1.msra.mxu0 0.0
        %954 = vmatprep.subr.mxu0 0.0
        %955 = vmatpush1.msra.mxu0 0.0
        %956 = vmatprep.subr.mxu0 0.0
        %957 = vmatpush1.msra.mxu0 0.0
        %958 = vmatprep.subr.mxu0 0.0
        %959 = vmatpush1.msra.mxu0 0.0
        %960 = vmatprep.subr.mxu0 0.0
        %961 = vmatpush1.msra.mxu0 0.0
        %962 = vmatprep.subr.mxu0 0.0
        %963 = vmatpush1.msra.mxu0 0.0
        %964 = vmatprep.subr.mxu0 0.0
        %965 = vmatpush1.msra.mxu0 0.0
        %966 = vmatprep.subr.mxu0 0.0
        %967 = vmatpush1.msra.mxu0 0.0
        %968 = vmatprep.subr.mxu0 0.0
        %969 = vmatpush1.msra.mxu0 0.0
        %970 = vmatprep.subr.mxu0 0.0
        %971 = vmatpush1.msra.mxu0 0.0
        %972 = vmatprep.subr.mxu0 0.0
        %973 = vmatpush1.msra.mxu0 0.0
        %974 = vmatprep.subr.mxu0 0.0
        %975 = vmatpush1.msra.mxu0 0.0
        %976 = vmatprep.subr.mxu0 0.0
        %977 = vmatpush1.msra.mxu0 0.0
        %978 = vmatprep.subr.mxu0 0.0
        %979 = vmatpush1.msra.mxu0 0.0
        %980 = vmatprep.subr.mxu0 0.0
        %981 = vmatpush1.msra.mxu0 0.0
        %982 = vmatprep.subr.mxu0 0.0
        %983 = vmatpush1.msra.mxu0 0.0
        %984 = vmatprep.subr.mxu0 0.0
        %985 = vmatpush1.msra.mxu0 0.0
        %986 = vmatprep.subr.mxu0 0.0
        %987 = vmatpush1.msra.mxu0 0.0
        %988 = vmatprep.subr.mxu0 0.0
        %989 = vmatpush1.msra.mxu0 0.0
        %990 = vmatprep.subr.mxu0 0.0
        %991 = vmatpush1.msra.mxu0 0.0
        %992 = vmatprep.subr.mxu0 0.0
        %993 = vmatpush1.msra.mxu0 0.0
        %994 = vmatprep.subr.mxu0 0.0
        %995 = vmatpush1.msra.mxu0 0.0
        %996 = vmatprep.subr.mxu0 0.0
        %997 = vmatpush1.msra.mxu0 0.0
        %998 = vmatprep.subr.mxu0 0.0
        %999 = vmatpush1.msra.mxu0 0.0
        %1000 = vmatprep.subr.mxu0 0.0
        %1001 = vmatpush1.msra.mxu0 0.0
        %1002 = vmatprep.mubr.f32.mxu0 0.0
        %1003 = vmatmul.mubr.f32.gmra.mrb[0].mxu0 %v933
        %v1004 = vpop.f32.mrb[0].mxu0
        %v1005 = vadd.f32 0.0, %v1004
        %v1006 = vpop.f32.mrb[0].mxu0
        %1007 = vmatprep.mubr.f32.mxu0 0.0
        %1008 = vmatmul.mubr.f32.gmra.mrb[0].mxu0 %v936
        %v1009 = vpop.f32.mrb[0].mxu0
        %v1010 = vadd.f32 0.0, %v1009
        %v1011 = vpop.f32.mrb[0].mxu0
        %1012 = vdwg.mxu0
        %s1013 = scalar_lea.vmem [#allocation8], 320
        %v1014 = vld [vmem:[%s1013] sm:$0xff]
        %v1015 = vld [vmem:[%s1013 + $0x8] sm:$0xff]
        %v1016 = vld [vmem:[%s1013 + $0x10] sm:$0xff]
        %v1017 = vld [vmem:[%s1013 + $0x18] sm:$0xff]
        %v1018 = vld [vmem:[%s1013 + $0x20] sm:$0xff]
        %v1019 = vld [vmem:[%s1013 + $0x28] sm:$0xff]
        %v1020 = vld [vmem:[%s1013 + $0x30] sm:$0xff]
        %v1021 = vld [vmem:[%s1013 + $0x38] sm:$0xff]
        %v1022 = vld [vmem:[%s1013 + $0x40] sm:$0xff]
        %v1023 = vld [vmem:[%s1013 + $0x48] sm:$0xff]
        %v1024 = vld [vmem:[%s1013 + $0x50] sm:$0xff]
        %v1025 = vld [vmem:[%s1013 + $0x58] sm:$0xff]
        %v1026 = vld [vmem:[%s1013 + $0x60] sm:$0xff]
        %v1027 = vld [vmem:[%s1013 + $0x68] sm:$0xff]
        %v1028 = vld [vmem:[%s1013 + $0x70] sm:$0xff]
        %v1029 = vld [vmem:[%s1013 + $0x78] sm:$0xff]
        %v1030 = vld [vmem:[%s1013 + $0x80] sm:$0xf]
        %v1031 = vld [vmem:[%s1013 + $0x88] sm:$0xf]
        %v1032 = vld [vmem:[%s1013 + $0x90] sm:$0xf]
        %v1033 = vld [vmem:[%s1013 + $0x98] sm:$0xf]
        %v1035 = vsel %vm583, %v1005, 0
        %v1038 = vsel %vm583, %v1010, 0
        %v1041 = vsel %vm590, %v1030, 0
        %v1044 = vsel %vm590, %v1031, 0
        %v1047 = vsel %vm590, %v1032, 0
        %v1050 = vsel %vm590, %v1033, 0
        %1052 = vmatprep.subr.mxu0 %v1015
        %1053 = vmatpush1.msra.mxu0 %v1014
        %1054 = vmatprep.subr.mxu0 %v1019
        %1055 = vmatpush1.msra.mxu0 %v1018
        %1056 = vmatprep.subr.mxu0 %v1023
        %1057 = vmatpush1.msra.mxu0 %v1022
        %1058 = vmatprep.subr.mxu0 %v1027
        %1059 = vmatpush1.msra.mxu0 %v1026
        %1060 = vmatprep.subr.mxu0 %v1044
        %1061 = vmatpush1.msra.mxu0 %v1041
        %1062 = vmatprep.subr.mxu0 0.0
        %1063 = vmatpush1.msra.mxu0 0.0
        %1064 = vmatprep.subr.mxu0 0.0
        %1065 = vmatpush1.msra.mxu0 0.0
        %1066 = vmatprep.subr.mxu0 0.0
        %1067 = vmatpush1.msra.mxu0 0.0
        %1068 = vmatprep.subr.mxu0 0.0
        %1069 = vmatpush1.msra.mxu0 0.0
        %1070 = vmatprep.subr.mxu0 0.0
        %1071 = vmatpush1.msra.mxu0 0.0
        %1072 = vmatprep.subr.mxu0 0.0
        %1073 = vmatpush1.msra.mxu0 0.0
        %1074 = vmatprep.subr.mxu0 0.0
        %1075 = vmatpush1.msra.mxu0 0.0
        %1076 = vmatprep.subr.mxu0 0.0
        %1077 = vmatpush1.msra.mxu0 0.0
        %1078 = vmatprep.subr.mxu0 0.0
        %1079 = vmatpush1.msra.mxu0 0.0
        %1080 = vmatprep.subr.mxu0 0.0
        %1081 = vmatpush1.msra.mxu0 0.0
        %1082 = vmatprep.subr.mxu0 0.0
        %1083 = vmatpush1.msra.mxu0 0.0
        %1084 = vmatprep.subr.mxu0 0.0
        %1085 = vmatpush1.msra.mxu0 0.0
        %1086 = vmatprep.subr.mxu0 0.0
        %1087 = vmatpush1.msra.mxu0 0.0
        %1088 = vmatprep.subr.mxu0 0.0
        %1089 = vmatpush1.msra.mxu0 0.0
        %1090 = vmatprep.subr.mxu0 0.0
        %1091 = vmatpush1.msra.mxu0 0.0
        %1092 = vmatprep.subr.mxu0 0.0
        %1093 = vmatpush1.msra.mxu0 0.0
        %1094 = vmatprep.subr.mxu0 0.0
        %1095 = vmatpush1.msra.mxu0 0.0
        %1096 = vmatprep.subr.mxu0 0.0
        %1097 = vmatpush1.msra.mxu0 0.0
        %1098 = vmatprep.subr.mxu0 0.0
        %1099 = vmatpush1.msra.mxu0 0.0
        %1100 = vmatprep.subr.mxu0 0.0
        %1101 = vmatpush1.msra.mxu0 0.0
        %1102 = vmatprep.subr.mxu0 0.0
        %1103 = vmatpush1.msra.mxu0 0.0
        %1104 = vmatprep.subr.mxu0 0.0
        %1105 = vmatpush1.msra.mxu0 0.0
        %1106 = vmatprep.subr.mxu0 0.0
        %1107 = vmatpush1.msra.mxu0 0.0
        %1108 = vmatprep.subr.mxu0 0.0
        %1109 = vmatpush1.msra.mxu0 0.0
        %1110 = vmatprep.subr.mxu0 0.0
        %1111 = vmatpush1.msra.mxu0 0.0
        %1112 = vmatprep.subr.mxu0 0.0
        %1113 = vmatpush1.msra.mxu0 0.0
        %1114 = vmatprep.subr.mxu0 0.0
        %1115 = vmatpush1.msra.mxu0 0.0
        %1116 = vmatprep.mubr.f32.mxu0 0.0
        %1117 = vmatmul.mubr.f32.gmra.mrb[0].mxu0 %v1035
        %v1118 = vpop.f32.mrb[0].mxu0
        %v1119 = vadd.f32 0.0, %v1118
        %v1120 = vpop.f32.mrb[0].mxu0
        %v1121 = vadd.f32 0.0, %v1120
        %1122 = vmatprep.mubr.f32.mxu0 0.0
        %1123 = vmatmul.mubr.f32.gmra.mrb[0].mxu0 %v1038
        %v1124 = vpop.f32.mrb[0].mxu0
        %v1125 = vadd.f32 0.0, %v1124
        %v1126 = vpop.f32.mrb[0].mxu0
        %v1127 = vadd.f32 0.0, %v1126
        %1128 = vdwg.mxu0
        %1129 = vmatprep.subr.mxu0 %v1017
        %1130 = vmatpush1.msra.mxu0 %v1016
        %1131 = vmatprep.subr.mxu0 %v1021
        %1132 = vmatpush1.msra.mxu0 %v1020
        %1133 = vmatprep.subr.mxu0 %v1025
        %1134 = vmatpush1.msra.mxu0 %v1024
        %1135 = vmatprep.subr.mxu0 %v1029
        %1136 = vmatpush1.msra.mxu0 %v1028
        %1137 = vmatprep.subr.mxu0 %v1050
        %1138 = vmatpush1.msra.mxu0 %v1047
        %1139 = vmatprep.subr.mxu0 0.0
        %1140 = vmatpush1.msra.mxu0 0.0
        %1141 = vmatprep.subr.mxu0 0.0
        %1142 = vmatpush1.msra.mxu0 0.0
        %1143 = vmatprep.subr.mxu0 0.0
        %1144 = vmatpush1.msra.mxu0 0.0
        %1145 = vmatprep.subr.mxu0 0.0
        %1146 = vmatpush1.msra.mxu0 0.0
        %1147 = vmatprep.subr.mxu0 0.0
        %1148 = vmatpush1.msra.mxu0 0.0
        %1149 = vmatprep.subr.mxu0 0.0
        %1150 = vmatpush1.msra.mxu0 0.0
        %1151 = vmatprep.subr.mxu0 0.0
        %1152 = vmatpush1.msra.mxu0 0.0
        %1153 = vmatprep.subr.mxu0 0.0
        %1154 = vmatpush1.msra.mxu0 0.0
        %1155 = vmatprep.subr.mxu0 0.0
        %1156 = vmatpush1.msra.mxu0 0.0
        %1157 = vmatprep.subr.mxu0 0.0
        %1158 = vmatpush1.msra.mxu0 0.0
        %1159 = vmatprep.subr.mxu0 0.0
        %1160 = vmatpush1.msra.mxu0 0.0
        %1161 = vmatprep.subr.mxu0 0.0
        %1162 = vmatpush1.msra.mxu0 0.0
        %1163 = vmatprep.subr.mxu0 0.0
        %1164 = vmatpush1.msra.mxu0 0.0
        %1165 = vmatprep.subr.mxu0 0.0
        %1166 = vmatpush1.msra.mxu0 0.0
        %1167 = vmatprep.subr.mxu0 0.0
        %1168 = vmatpush1.msra.mxu0 0.0
        %1169 = vmatprep.subr.mxu0 0.0
        %1170 = vmatpush1.msra.mxu0 0.0
        %1171 = vmatprep.subr.mxu0 0.0
        %1172 = vmatpush1.msra.mxu0 0.0
        %1173 = vmatprep.subr.mxu0 0.0
        %1174 = vmatpush1.msra.mxu0 0.0
        %1175 = vmatprep.subr.mxu0 0.0
        %1176 = vmatpush1.msra.mxu0 0.0
        %1177 = vmatprep.subr.mxu0 0.0
        %1178 = vmatpush1.msra.mxu0 0.0
        %1179 = vmatprep.subr.mxu0 0.0
        %1180 = vmatpush1.msra.mxu0 0.0
        %1181 = vmatprep.subr.mxu0 0.0
        %1182 = vmatpush1.msra.mxu0 0.0
        %1183 = vmatprep.subr.mxu0 0.0
        %1184 = vmatpush1.msra.mxu0 0.0
        %1185 = vmatprep.subr.mxu0 0.0
        %1186 = vmatpush1.msra.mxu0 0.0
        %1187 = vmatprep.subr.mxu0 0.0
        %1188 = vmatpush1.msra.mxu0 0.0
        %1189 = vmatprep.subr.mxu0 0.0
        %1190 = vmatpush1.msra.mxu0 0.0
        %1191 = vmatprep.subr.mxu0 0.0
        %1192 = vmatpush1.msra.mxu0 0.0
        %1193 = vmatprep.mubr.f32.mxu0 0.0
        %1194 = vmatmul.mubr.f32.gmra.mrb[0].mxu0 %v1035
        %v1195 = vpop.f32.mrb[0].mxu0
        %v1196 = vadd.f32 0.0, %v1195
        %v1197 = vpop.f32.mrb[0].mxu0
        %v1198 = vadd.f32 0.0, %v1197
        %1199 = vmatprep.mubr.f32.mxu0 0.0
        %1200 = vmatmul.mubr.f32.gmra.mrb[0].mxu0 %v1038
        %v1201 = vpop.f32.mrb[0].mxu0
        %v1202 = vadd.f32 0.0, %v1201
        %v1203 = vpop.f32.mrb[0].mxu0
        %v1204 = vadd.f32 0.0, %v1203
        %1205 = vdwg.mxu0
        %v1206 = vadd.f32 %v842, %v1119
        %v1207 = vadd.f32 %v844, %v1121
        %v1208 = vadd.f32 %v919, %v1196
        %v1209 = vadd.f32 %v921, %v1198
        %v1210 = vadd.f32 %v848, %v1125
        %v1211 = vadd.f32 %v850, %v1127
        %v1212 = vadd.f32 %v925, %v1202
        %v1213 = vadd.f32 %v927, %v1204
        %v1214 = vld [vmem:[%s7] sm:$0xff]
        %v1215 = vld [vmem:[%s7 + $0x8] sm:$0xff]
        %1217 = vset.pattern.permute.xlu0 0
        %1218 = vperm.xlu0 %1217, %v456
        %v1219 = vpop.permute.xlu0 %1218
        %1222 = vset.pattern.permute.xlu0 0
        %1223 = vperm.xlu0 %1222, %v457
        %v1224 = vpop.permute.xlu0 %1223
        %v1226 = vmul.f32 %v1206, %v1219
        %v1227 = vmul.f32 %v1210, %v1224
        %v1228 = vadd.f32 %v1214, %v1226
        %v1229 = vadd.f32 %v1215, %v1227
        %1230 = vset.pattern.permute.xlu0 1
        %1231 = vperm.xlu0 %1230, %v456
        %v1232 = vpop.permute.xlu0 %1231
        %1234 = vset.pattern.permute.xlu0 1
        %1235 = vperm.xlu0 %1234, %v457
        %v1236 = vpop.permute.xlu0 %1235
        %v1238 = vmul.f32 %v1206, %v1232
        %v1239 = vmul.f32 %v1210, %v1236
        %1242 = vrot.lane.b32.xlu0 %v1238, 64
        %v1243 = vpop.permute.xlu0 %1242
        %1244 = vrot.lane.b32.xlu0 %v1239, 64
        %v1245 = vpop.permute.xlu0 %1244
        %v1248 = vadd.f32 %v1228, %v1243
        %v1249 = vadd.f32 %v1229, %v1245
        %1250 = vset.pattern.permute.xlu0 2
        %1251 = vperm.xlu0 %1250, %v456
        %v1252 = vpop.permute.xlu0 %1251
        %1254 = vset.pattern.permute.xlu0 2
        %1255 = vperm.xlu0 %1254, %v457
        %v1256 = vpop.permute.xlu0 %1255
        %v1258 = vmul.f32 %v1207, %v1252
        %v1259 = vmul.f32 %v1211, %v1256
        %v1260 = vadd.f32 %v1248, %v1258
        %v1261 = vadd.f32 %v1249, %v1259
        %1262 = vset.pattern.permute.xlu0 3
        %1263 = vperm.xlu0 %1262, %v456
        %v1264 = vpop.permute.xlu0 %1263
        %1266 = vset.pattern.permute.xlu0 3
        %1267 = vperm.xlu0 %1266, %v457
        %v1268 = vpop.permute.xlu0 %1267
        %v1270 = vmul.f32 %v1207, %v1264
        %v1271 = vmul.f32 %v1211, %v1268
        %1274 = vrot.lane.b32.xlu0 %v1270, 64
        %v1275 = vpop.permute.xlu0 %1274
        %1276 = vrot.lane.b32.xlu0 %v1271, 64
        %v1277 = vpop.permute.xlu0 %1276
        %v1280 = vadd.f32 %v1260, %v1275
        %v1281 = vadd.f32 %v1261, %v1277
        %1282 = vset.pattern.permute.xlu0 4
        %1283 = vperm.xlu0 %1282, %v456
        %v1284 = vpop.permute.xlu0 %1283
        %1286 = vset.pattern.permute.xlu0 4
        %1287 = vperm.xlu0 %1286, %v457
        %v1288 = vpop.permute.xlu0 %1287
        %v1290 = vmul.f32 %v1208, %v1284
        %v1291 = vmul.f32 %v1212, %v1288
        %v1292 = vadd.f32 %v1280, %v1290
        %v1293 = vadd.f32 %v1281, %v1291
        %1294 = vset.pattern.permute.xlu0 5
        %1295 = vperm.xlu0 %1294, %v456
        %v1296 = vpop.permute.xlu0 %1295
        %1298 = vset.pattern.permute.xlu0 5
        %1299 = vperm.xlu0 %1298, %v457
        %v1300 = vpop.permute.xlu0 %1299
        %v1302 = vmul.f32 %v1208, %v1296
        %v1303 = vmul.f32 %v1212, %v1300
        %1306 = vrot.lane.b32.xlu0 %v1302, 64
        %v1307 = vpop.permute.xlu0 %1306
        %1308 = vrot.lane.b32.xlu0 %v1303, 64
        %v1309 = vpop.permute.xlu0 %1308
        %v1312 = vadd.f32 %v1292, %v1307
        %v1313 = vadd.f32 %v1293, %v1309
        %1314 = vset.pattern.permute.xlu0 6
        %1315 = vperm.xlu0 %1314, %v456
        %v1316 = vpop.permute.xlu0 %1315
        %1318 = vset.pattern.permute.xlu0 6
        %1319 = vperm.xlu0 %1318, %v457
        %v1320 = vpop.permute.xlu0 %1319
        %v1322 = vmul.f32 %v1209, %v1316
        %v1323 = vmul.f32 %v1213, %v1320
        %v1324 = vadd.f32 %v1312, %v1322
        %v1325 = vadd.f32 %v1313, %v1323
        %1326 = vset.pattern.permute.xlu0 7
        %1327 = vperm.xlu0 %1326, %v456
        %v1328 = vpop.permute.xlu0 %1327
        %1330 = vset.pattern.permute.xlu0 7
        %1331 = vperm.xlu0 %1330, %v457
        %v1332 = vpop.permute.xlu0 %1331
        %v1334 = vmul.f32 %v1209, %v1328
        %v1335 = vmul.f32 %v1213, %v1332
        %1338 = vrot.lane.b32.xlu0 %v1334, 64
        %v1339 = vpop.permute.xlu0 %1338
        %1340 = vrot.lane.b32.xlu0 %v1335, 64
        %v1341 = vpop.permute.xlu0 %1340
        %v1344 = vadd.f32 %v1324, %v1339
        %v1345 = vadd.f32 %v1325, %v1341
        %v1346 = vxor.u32 %v1344, 2147483648
        %v1347 = vxor.u32 %v1345, 2147483648
        %v1348 = vmul.f32 %v1346, 1.442695
        %v1349 = vpow.pop %v1348
        %v1350 = vmul.f32 %v1347, 1.442695
        %v1351 = vpow.pop %v1350
        %v1352 = vadd.f32 %v1349, 1.0
        %v1353 = vadd.f32 %v1351, 1.0
        %v1354 = vrcp.pop %v1352
        %v1355 = vmul.f32 1.0, %v1354
        %v1356 = vrcp.pop %v1353
        %v1357 = vmul.f32 1.0, %v1356
        %v1358 = vmul.f32 %v1355, %v454
        %v1359 = vmul.f32 %v1357, %v455
        %v1360 = vld [vmem:[#allocation10] sm:$0xff]
        %v1361 = vld [vmem:[#allocation10 + $0x8] sm:$0xff]
        %v1362 = vld [vmem:[#allocation10 + $0x10] sm:$0xff]
        %v1363 = vld [vmem:[#allocation10 + $0x18] sm:$0xff]
        %v1364 = vld [vmem:[#allocation10 + $0x20] sm:$0xff]
        %v1365 = vld [vmem:[#allocation10 + $0x28] sm:$0xff]
        %v1366 = vld [vmem:[#allocation10 + $0x30] sm:$0xff]
        %v1367 = vld [vmem:[#allocation10 + $0x38] sm:$0xff]
        %v1368 = vld [vmem:[#allocation10 + $0x40] sm:$0xf]
        %v1369 = vld [vmem:[#allocation10 + $0x48] sm:$0xf]
        %v1370 = vld [vmem:[#allocation11] sm:$0xff]
        %v1371 = vld [vmem:[#allocation11 + $0x8] sm:$0xff]
        %v1372 = vld [vmem:[#allocation11 + $0x10] sm:$0xff]
        %v1373 = vld [vmem:[#allocation11 + $0x18] sm:$0xff]
        %v1374 = vld [vmem:[#allocation11 + $0x20] sm:$0xff]
        %v1375 = vld [vmem:[#allocation11 + $0x28] sm:$0xff]
        %v1376 = vld [vmem:[#allocation11 + $0x30] sm:$0xff]
        %v1377 = vld [vmem:[#allocation11 + $0x38] sm:$0xff]
        %vm1378 = vcmask 261120
        %v1380 = vsel %vm1378, %v1358, 0
        %v1383 = vsel %vm1378, %v1359, 0
        %1385 = vmatprep.subr.mxu0 %v1371
        %1386 = vmatpush1.msra.mxu0 %v1370
        %1387 = vmatprep.subr.mxu0 %v1373
        %1388 = vmatpush1.msra.mxu0 %v1372
        %1389 = vmatprep.subr.mxu0 %v1375
        %1390 = vmatpush1.msra.mxu0 %v1374
        %1391 = vmatprep.subr.mxu0 %v1377
        %1392 = vmatpush1.msra.mxu0 %v1376
        %1393 = vmatprep.subr.mxu0 0.0
        %1394 = vmatpush1.msra.mxu0 0.0
        %1395 = vmatprep.subr.mxu0 0.0
        %1396 = vmatpush1.msra.mxu0 0.0
        %1397 = vmatprep.subr.mxu0 0.0
        %1398 = vmatpush1.msra.mxu0 0.0
        %1399 = vmatprep.subr.mxu0 0.0
        %1400 = vmatpush1.msra.mxu0 0.0
        %1401 = vmatprep.subr.mxu0 0.0
        %1402 = vmatpush1.msra.mxu0 0.0
        %1403 = vmatprep.subr.mxu0 0.0
        %1404 = vmatpush1.msra.mxu0 0.0
        %1405 = vmatprep.subr.mxu0 0.0
        %1406 = vmatpush1.msra.mxu0 0.0
        %1407 = vmatprep.subr.mxu0 0.0
        %1408 = vmatpush1.msra.mxu0 0.0
        %1409 = vmatprep.subr.mxu0 0.0
        %1410 = vmatpush1.msra.mxu0 0.0
        %1411 = vmatprep.subr.mxu0 0.0
        %1412 = vmatpush1.msra.mxu0 0.0
        %1413 = vmatprep.subr.mxu0 0.0
        %1414 = vmatpush1.msra.mxu0 0.0
        %1415 = vmatprep.subr.mxu0 0.0
        %1416 = vmatpush1.msra.mxu0 0.0
        %1417 = vmatprep.subr.mxu0 0.0
        %1418 = vmatpush1.msra.mxu0 0.0
        %1419 = vmatprep.subr.mxu0 0.0
        %1420 = vmatpush1.msra.mxu0 0.0
        %1421 = vmatprep.subr.mxu0 0.0
        %1422 = vmatpush1.msra.mxu0 0.0
        %1423 = vmatprep.subr.mxu0 0.0
        %1424 = vmatpush1.msra.mxu0 0.0
        %1425 = vmatprep.subr.mxu0 0.0
        %1426 = vmatpush1.msra.mxu0 0.0
        %1427 = vmatprep.subr.mxu0 0.0
        %1428 = vmatpush1.msra.mxu0 0.0
        %1429 = vmatprep.subr.mxu0 0.0
        %1430 = vmatpush1.msra.mxu0 0.0
        %1431 = vmatprep.subr.mxu0 0.0
        %1432 = vmatpush1.msra.mxu0 0.0
        %1433 = vmatprep.subr.mxu0 0.0
        %1434 = vmatpush1.msra.mxu0 0.0
        %1435 = vmatprep.subr.mxu0 0.0
        %1436 = vmatpush1.msra.mxu0 0.0
        %1437 = vmatprep.subr.mxu0 0.0
        %1438 = vmatpush1.msra.mxu0 0.0
        %1439 = vmatprep.subr.mxu0 0.0
        %1440 = vmatpush1.msra.mxu0 0.0
        %1441 = vmatprep.subr.mxu0 0.0
        %1442 = vmatpush1.msra.mxu0 0.0
        %1443 = vmatprep.subr.mxu0 0.0
        %1444 = vmatpush1.msra.mxu0 0.0
        %1445 = vmatprep.subr.mxu0 0.0
        %1446 = vmatpush1.msra.mxu0 0.0
        %1447 = vmatprep.subr.mxu0 0.0
        %1448 = vmatpush1.msra.mxu0 0.0
        %1449 = vmatprep.mubr.f32.mxu0 0.0
        %1450 = vmatmul.mubr.f32.gmra.mrb[0].mxu0 %v1380
        %v1451 = vpop.f32.mrb[0].mxu0
        %v1452 = vadd.f32 0.0, %v1451
        %v1453 = vpop.f32.mrb[0].mxu0
        %v1454 = vadd.f32 0.0, %v1453
        %1455 = vmatprep.mubr.f32.mxu0 0.0
        %1456 = vmatmul.mubr.f32.gmra.mrb[0].mxu0 %v1383
        %v1457 = vpop.f32.mrb[0].mxu0
        %v1458 = vadd.f32 0.0, %v1457
        %v1459 = vpop.f32.mrb[0].mxu0
        %v1460 = vadd.f32 0.0, %v1459
        %1461 = vdwg.mxu0
        %v1463 = vsel %vm590, %v1368, 0
        %v1466 = vsel %vm590, %v1369, 0
        %1468 = vmatprep.subr.mxu0 %v1361
        %1469 = vmatpush1.msra.mxu0 %v1360
        %1470 = vmatprep.subr.mxu0 %v1363
        %1471 = vmatpush1.msra.mxu0 %v1362
        %1472 = vmatprep.subr.mxu0 %v1365
        %1473 = vmatpush1.msra.mxu0 %v1364
        %1474 = vmatprep.subr.mxu0 %v1367
        %1475 = vmatpush1.msra.mxu0 %v1366
        %1476 = vmatprep.subr.mxu0 %v1466
        %1477 = vmatpush1.msra.mxu0 %v1463
        %1478 = vmatprep.subr.mxu0 0.0
        %1479 = vmatpush1.msra.mxu0 0.0
        %1480 = vmatprep.subr.mxu0 0.0
        %1481 = vmatpush1.msra.mxu0 0.0
        %1482 = vmatprep.subr.mxu0 0.0
        %1483 = vmatpush1.msra.mxu0 0.0
        %1484 = vmatprep.subr.mxu0 0.0
        %1485 = vmatpush1.msra.mxu0 0.0
        %1486 = vmatprep.subr.mxu0 0.0
        %1487 = vmatpush1.msra.mxu0 0.0
        %1488 = vmatprep.subr.mxu0 0.0
        %1489 = vmatpush1.msra.mxu0 0.0
        %1490 = vmatprep.subr.mxu0 0.0
        %1491 = vmatpush1.msra.mxu0 0.0
        %1492 = vmatprep.subr.mxu0 0.0
        %1493 = vmatpush1.msra.mxu0 0.0
        %1494 = vmatprep.subr.mxu0 0.0
        %1495 = vmatpush1.msra.mxu0 0.0
        %1496 = vmatprep.subr.mxu0 0.0
        %1497 = vmatpush1.msra.mxu0 0.0
        %1498 = vmatprep.subr.mxu0 0.0
        %1499 = vmatpush1.msra.mxu0 0.0
        %1500 = vmatprep.subr.mxu0 0.0
        %1501 = vmatpush1.msra.mxu0 0.0
        %1502 = vmatprep.subr.mxu0 0.0
        %1503 = vmatpush1.msra.mxu0 0.0
        %1504 = vmatprep.subr.mxu0 0.0
        %1505 = vmatpush1.msra.mxu0 0.0
        %1506 = vmatprep.subr.mxu0 0.0
        %1507 = vmatpush1.msra.mxu0 0.0
        %1508 = vmatprep.subr.mxu0 0.0
        %1509 = vmatpush1.msra.mxu0 0.0
        %1510 = vmatprep.subr.mxu0 0.0
        %1511 = vmatpush1.msra.mxu0 0.0
        %1512 = vmatprep.subr.mxu0 0.0
        %1513 = vmatpush1.msra.mxu0 0.0
        %1514 = vmatprep.subr.mxu0 0.0
        %1515 = vmatpush1.msra.mxu0 0.0
        %1516 = vmatprep.subr.mxu0 0.0
        %1517 = vmatpush1.msra.mxu0 0.0
        %1518 = vmatprep.subr.mxu0 0.0
        %1519 = vmatpush1.msra.mxu0 0.0
        %1520 = vmatprep.subr.mxu0 0.0
        %1521 = vmatpush1.msra.mxu0 0.0
        %1522 = vmatprep.subr.mxu0 0.0
        %1523 = vmatpush1.msra.mxu0 0.0
        %1524 = vmatprep.subr.mxu0 0.0
        %1525 = vmatpush1.msra.mxu0 0.0
        %1526 = vmatprep.subr.mxu0 0.0
        %1527 = vmatpush1.msra.mxu0 0.0
        %1528 = vmatprep.subr.mxu0 0.0
        %1529 = vmatpush1.msra.mxu0 0.0
        %1530 = vmatprep.subr.mxu0 0.0
        %1531 = vmatpush1.msra.mxu0 0.0
        %1532 = vmatprep.mubr.f32.mxu0 0.0
        %1533 = vmatmul.mubr.f32.gmra.mrb[0].mxu0 %v758
        %v1534 = vpop.f32.mrb[0].mxu0
        %v1535 = vadd.f32 %v1452, %v1534
        %v1536 = vpop.f32.mrb[0].mxu0
        %v1537 = vadd.f32 %v1454, %v1536
        %1538 = vmatprep.mubr.f32.mxu0 0.0
        %1539 = vmatmul.mubr.f32.gmra.mrb[0].mxu0 %v761
        %v1540 = vpop.f32.mrb[0].mxu0
        %v1541 = vadd.f32 %v1458, %v1540
        %v1542 = vpop.f32.mrb[0].mxu0
        %v1543 = vadd.f32 %v1460, %v1542
        %1544 = vdwg.mxu0
        %1545 = vmatprep.subr.mxu0 0.0
        %1546 = vmatpush1.msra.mxu0 %v1358
        %1547 = vmatprep.subr.mxu0 0.0
        %1548 = vmatpush1.msra.mxu0 %v1359
        %1549 = vmatprep.subr.mxu0 0.0
        %1550 = vmatpush1.msra.mxu0 0.0
        %1551 = vmatprep.subr.mxu0 0.0
        %1552 = vmatpush1.msra.mxu0 0.0
        %1553 = vmatprep.subr.mxu0 0.0
        %1554 = vmatpush1.msra.mxu0 0.0
        %1555 = vmatprep.subr.mxu0 0.0
        %1556 = vmatpush1.msra.mxu0 0.0
        %1557 = vmatprep.subr.mxu0 0.0
        %1558 = vmatpush1.msra.mxu0 0.0
        %1559 = vmatprep.subr.mxu0 0.0
        %1560 = vmatpush1.msra.mxu0 0.0
        %1561 = vmatprep.subr.mxu0 0.0
        %1562 = vmatpush1.msra.mxu0 0.0
        %1563 = vmatprep.subr.mxu0 0.0
        %1564 = vmatpush1.msra.mxu0 0.0
        %1565 = vmatprep.subr.mxu0 0.0
        %1566 = vmatpush1.msra.mxu0 0.0
        %1567 = vmatprep.subr.mxu0 0.0
        %1568 = vmatpush1.msra.mxu0 0.0
        %1569 = vmatprep.subr.mxu0 0.0
        %1570 = vmatpush1.msra.mxu0 0.0
        %1571 = vmatprep.subr.mxu0 0.0
        %1572 = vmatpush1.msra.mxu0 0.0
        %1573 = vmatprep.subr.mxu0 0.0
        %1574 = vmatpush1.msra.mxu0 0.0
        %1575 = vmatprep.subr.mxu0 0.0
        %1576 = vmatpush1.msra.mxu0 0.0
        %1577 = vmatprep.subr.mxu0 0.0
        %1578 = vmatpush1.msra.mxu0 0.0
        %1579 = vmatprep.subr.mxu0 0.0
        %1580 = vmatpush1.msra.mxu0 0.0
        %1581 = vmatprep.subr.mxu0 0.0
        %1582 = vmatpush1.msra.mxu0 0.0
        %1583 = vmatprep.subr.mxu0 0.0
        %1584 = vmatpush1.msra.mxu0 0.0
        %1585 = vmatprep.subr.mxu0 0.0
        %1586 = vmatpush1.msra.mxu0 0.0
        %1587 = vmatprep.subr.mxu0 0.0
        %1588 = vmatpush1.msra.mxu0 0.0
        %1589 = vmatprep.subr.mxu0 0.0
        %1590 = vmatpush1.msra.mxu0 0.0
        %1591 = vmatprep.subr.mxu0 0.0
        %1592 = vmatpush1.msra.mxu0 0.0
        %1593 = vmatprep.subr.mxu0 0.0
        %1594 = vmatpush1.msra.mxu0 0.0
        %1595 = vmatprep.subr.mxu0 0.0
        %1596 = vmatpush1.msra.mxu0 0.0
        %1597 = vmatprep.subr.mxu0 0.0
        %1598 = vmatpush1.msra.mxu0 0.0
        %1599 = vmatprep.subr.mxu0 0.0
        %1600 = vmatpush1.msra.mxu0 0.0
        %1601 = vmatprep.subr.mxu0 0.0
        %1602 = vmatpush1.msra.mxu0 0.0
        %1603 = vmatprep.subr.mxu0 0.0
        %1604 = vmatpush1.msra.mxu0 0.0
        %1605 = vmatprep.subr.mxu0 0.0
        %1606 = vmatpush1.msra.mxu0 0.0
        %1607 = vmatprep.subr.mxu0 0.0
        %1608 = vmatpush1.msra.mxu0 0.0
        %1609 = vmatprep.mubr.f32.mxu0 0.0
        %1610 = vmatmul.mubr.f32.gmra.mrb[0].mxu0 %v482
        %v1611 = vpop.f32.mrb[0].mxu0
        %v1612 = vadd.f32 0.0, %v1611
        %v1613 = vpop.f32.mrb[0].mxu0
        %1614 = vmatprep.mubr.f32.mxu0 0.0
        %1615 = vmatmul.mubr.f32.gmra.mrb[0].mxu0 %v485
        %v1616 = vpop.f32.mrb[0].mxu0
        %v1617 = vadd.f32 0.0, %v1616
        %v1618 = vpop.f32.mrb[0].mxu0
        %1619 = vdwg.mxu0
        %s1620 = scalar_lea.vmem [#allocation10], 80
        %v1621 = vld [vmem:[%s1620] sm:$0xff]
        %v1622 = vld [vmem:[%s1620 + $0x8] sm:$0xff]
        %v1623 = vld [vmem:[%s1620 + $0x10] sm:$0xff]
        %v1624 = vld [vmem:[%s1620 + $0x18] sm:$0xff]
        %v1625 = vld [vmem:[%s1620 + $0x20] sm:$0xff]
        %v1626 = vld [vmem:[%s1620 + $0x28] sm:$0xff]
        %v1627 = vld [vmem:[%s1620 + $0x30] sm:$0xff]
        %v1628 = vld [vmem:[%s1620 + $0x38] sm:$0xff]
        %v1629 = vld [vmem:[%s1620 + $0x40] sm:$0xf]
        %v1630 = vld [vmem:[%s1620 + $0x48] sm:$0xf]
        %v1632 = vsel %vm590, %v1629, 0
        %v1635 = vsel %vm590, %v1630, 0
        %1637 = vmatprep.subr.mxu0 %v1622
        %1638 = vmatpush1.msra.mxu0 %v1621
        %1639 = vmatprep.subr.mxu0 %v1624
        %1640 = vmatpush1.msra.mxu0 %v1623
        %1641 = vmatprep.subr.mxu0 %v1626
        %1642 = vmatpush1.msra.mxu0 %v1625
        %1643 = vmatprep.subr.mxu0 %v1628
        %1644 = vmatpush1.msra.mxu0 %v1627
        %1645 = vmatprep.subr.mxu0 %v1635
        %1646 = vmatpush1.msra.mxu0 %v1632
        %1647 = vmatprep.subr.mxu0 0.0
        %1648 = vmatpush1.msra.mxu0 0.0
        %1649 = vmatprep.subr.mxu0 0.0
        %1650 = vmatpush1.msra.mxu0 0.0
        %1651 = vmatprep.subr.mxu0 0.0
        %1652 = vmatpush1.msra.mxu0 0.0
        %1653 = vmatprep.subr.mxu0 0.0
        %1654 = vmatpush1.msra.mxu0 0.0
        %1655 = vmatprep.subr.mxu0 0.0
        %1656 = vmatpush1.msra.mxu0 0.0
        %1657 = vmatprep.subr.mxu0 0.0
        %1658 = vmatpush1.msra.mxu0 0.0
        %1659 = vmatprep.subr.mxu0 0.0
        %1660 = vmatpush1.msra.mxu0 0.0
        %1661 = vmatprep.subr.mxu0 0.0
        %1662 = vmatpush1.msra.mxu0 0.0
        %1663 = vmatprep.subr.mxu0 0.0
        %1664 = vmatpush1.msra.mxu0 0.0
        %1665 = vmatprep.subr.mxu0 0.0
        %1666 = vmatpush1.msra.mxu0 0.0
        %1667 = vmatprep.subr.mxu0 0.0
        %1668 = vmatpush1.msra.mxu0 0.0
        %1669 = vmatprep.subr.mxu0 0.0
        %1670 = vmatpush1.msra.mxu0 0.0
        %1671 = vmatprep.subr.mxu0 0.0
        %1672 = vmatpush1.msra.mxu0 0.0
        %1673 = vmatprep.subr.mxu0 0.0
        %1674 = vmatpush1.msra.mxu0 0.0
        %1675 = vmatprep.subr.mxu0 0.0
        %1676 = vmatpush1.msra.mxu0 0.0
        %1677 = vmatprep.subr.mxu0 0.0
        %1678 = vmatpush1.msra.mxu0 0.0
        %1679 = vmatprep.subr.mxu0 0.0
        %1680 = vmatpush1.msra.mxu0 0.0
        %1681 = vmatprep.subr.mxu0 0.0
        %1682 = vmatpush1.msra.mxu0 0.0
        %1683 = vmatprep.subr.mxu0 0.0
        %1684 = vmatpush1.msra.mxu0 0.0
        %1685 = vmatprep.subr.mxu0 0.0
        %1686 = vmatpush1.msra.mxu0 0.0
        %1687 = vmatprep.subr.mxu0 0.0
        %1688 = vmatpush1.msra.mxu0 0.0
        %1689 = vmatprep.subr.mxu0 0.0
        %1690 = vmatpush1.msra.mxu0 0.0
        %1691 = vmatprep.subr.mxu0 0.0
        %1692 = vmatpush1.msra.mxu0 0.0
        %1693 = vmatprep.subr.mxu0 0.0
        %1694 = vmatpush1.msra.mxu0 0.0
        %1695 = vmatprep.subr.mxu0 0.0
        %1696 = vmatpush1.msra.mxu0 0.0
        %1697 = vmatprep.subr.mxu0 0.0
        %1698 = vmatpush1.msra.mxu0 0.0
        %1699 = vmatprep.subr.mxu0 0.0
        %1700 = vmatpush1.msra.mxu0 0.0
        %1701 = vmatprep.mubr.f32.mxu0 0.0
        %1702 = vmatmul.mubr.f32.gmra.mrb[0].mxu0 %v585
        %v1703 = vpop.f32.mrb[0].mxu0
        %v1704 = vadd.f32 0.0, %v1703
        %v1705 = vpop.f32.mrb[0].mxu0
        %v1706 = vadd.f32 0.0, %v1705
        %1707 = vmatprep.mubr.f32.mxu0 0.0
        %1708 = vmatmul.mubr.f32.gmra.mrb[0].mxu0 %v588
        %v1709 = vpop.f32.mrb[0].mxu0
        %v1710 = vadd.f32 0.0, %v1709
        %v1711 = vpop.f32.mrb[0].mxu0
        %v1712 = vadd.f32 0.0, %v1711
        %1713 = vdwg.mxu0
        %v1714 = vadd.f32 %v1535, %v1704
        %v1715 = vadd.f32 %v1537, %v1706
        %v1716 = vadd.f32 %v1541, %v1710
        %v1717 = vadd.f32 %v1543, %v1712
        %s1718 = scalar_lea.vmem [#allocation11], 64
        %v1719 = vld [vmem:[%s1718] sm:$0xff]
        %v1720 = vld [vmem:[%s1718 + $0x8] sm:$0xff]
        %v1721 = vld [vmem:[%s1718 + $0x10] sm:$0xff]
        %v1722 = vld [vmem:[%s1718 + $0x18] sm:$0xff]
        %v1723 = vld [vmem:[%s1718 + $0x20] sm:$0xff]
        %v1724 = vld [vmem:[%s1718 + $0x28] sm:$0xff]
        %v1725 = vld [vmem:[%s1718 + $0x30] sm:$0xff]
        %v1726 = vld [vmem:[%s1718 + $0x38] sm:$0xff]
        %v1728 = vsel %vm1378, %v1612, 0
        %v1731 = vsel %vm1378, %v1617, 0
        %1733 = vmatprep.subr.mxu0 %v1720
        %1734 = vmatpush1.msra.mxu0 %v1719
        %1735 = vmatprep.subr.mxu0 %v1722
        %1736 = vmatpush1.msra.mxu0 %v1721
        %1737 = vmatprep.subr.mxu0 %v1724
        %1738 = vmatpush1.msra.mxu0 %v1723
        %1739 = vmatprep.subr.mxu0 %v1726
        %1740 = vmatpush1.msra.mxu0 %v1725
        %1741 = vmatprep.subr.mxu0 0.0
        %1742 = vmatpush1.msra.mxu0 0.0
        %1743 = vmatprep.subr.mxu0 0.0
        %1744 = vmatpush1.msra.mxu0 0.0
        %1745 = vmatprep.subr.mxu0 0.0
        %1746 = vmatpush1.msra.mxu0 0.0
        %1747 = vmatprep.subr.mxu0 0.0
        %1748 = vmatpush1.msra.mxu0 0.0
        %1749 = vmatprep.subr.mxu0 0.0
        %1750 = vmatpush1.msra.mxu0 0.0
        %1751 = vmatprep.subr.mxu0 0.0
        %1752 = vmatpush1.msra.mxu0 0.0
        %1753 = vmatprep.subr.mxu0 0.0
        %1754 = vmatpush1.msra.mxu0 0.0
        %1755 = vmatprep.subr.mxu0 0.0
        %1756 = vmatpush1.msra.mxu0 0.0
        %1757 = vmatprep.subr.mxu0 0.0
        %1758 = vmatpush1.msra.mxu0 0.0
        %1759 = vmatprep.subr.mxu0 0.0
        %1760 = vmatpush1.msra.mxu0 0.0
        %1761 = vmatprep.subr.mxu0 0.0
        %1762 = vmatpush1.msra.mxu0 0.0
        %1763 = vmatprep.subr.mxu0 0.0
        %1764 = vmatpush1.msra.mxu0 0.0
        %1765 = vmatprep.subr.mxu0 0.0
        %1766 = vmatpush1.msra.mxu0 0.0
        %1767 = vmatprep.subr.mxu0 0.0
        %1768 = vmatpush1.msra.mxu0 0.0
        %1769 = vmatprep.subr.mxu0 0.0
        %1770 = vmatpush1.msra.mxu0 0.0
        %1771 = vmatprep.subr.mxu0 0.0
        %1772 = vmatpush1.msra.mxu0 0.0
        %1773 = vmatprep.subr.mxu0 0.0
        %1774 = vmatpush1.msra.mxu0 0.0
        %1775 = vmatprep.subr.mxu0 0.0
        %1776 = vmatpush1.msra.mxu0 0.0
        %1777 = vmatprep.subr.mxu0 0.0
        %1778 = vmatpush1.msra.mxu0 0.0
        %1779 = vmatprep.subr.mxu0 0.0
        %1780 = vmatpush1.msra.mxu0 0.0
        %1781 = vmatprep.subr.mxu0 0.0
        %1782 = vmatpush1.msra.mxu0 0.0
        %1783 = vmatprep.subr.mxu0 0.0
        %1784 = vmatpush1.msra.mxu0 0.0
        %1785 = vmatprep.subr.mxu0 0.0
        %1786 = vmatpush1.msra.mxu0 0.0
        %1787 = vmatprep.subr.mxu0 0.0
        %1788 = vmatpush1.msra.mxu0 0.0
        %1789 = vmatprep.subr.mxu0 0.0
        %1790 = vmatpush1.msra.mxu0 0.0
        %1791 = vmatprep.subr.mxu0 0.0
        %1792 = vmatpush1.msra.mxu0 0.0
        %1793 = vmatprep.subr.mxu0 0.0
        %1794 = vmatpush1.msra.mxu0 0.0
        %1795 = vmatprep.subr.mxu0 0.0
        %1796 = vmatpush1.msra.mxu0 0.0
        %1797 = vmatprep.mubr.f32.mxu0 0.0
        %1798 = vmatmul.mubr.f32.gmra.mrb[0].mxu0 %v1728
        %v1799 = vpop.f32.mrb[0].mxu0
        %v1800 = vadd.f32 0.0, %v1799
        %v1801 = vpop.f32.mrb[0].mxu0
        %v1802 = vadd.f32 0.0, %v1801
        %1803 = vmatprep.mubr.f32.mxu0 0.0
        %1804 = vmatmul.mubr.f32.gmra.mrb[0].mxu0 %v1731
        %v1805 = vpop.f32.mrb[0].mxu0
        %v1806 = vadd.f32 0.0, %v1805
        %v1807 = vpop.f32.mrb[0].mxu0
        %v1808 = vadd.f32 0.0, %v1807
        %1809 = vdwg.mxu0
        %v1810 = vadd.f32 %v1714, %v1800
        %v1811 = vadd.f32 %v1715, %v1802
        %v1812 = vadd.f32 %v1716, %v1806
        %v1813 = vadd.f32 %v1717, %v1808
        %1814 = vmatprep.subr.mxu0 0.0
        %1815 = vmatpush1.msra.mxu0 %v1358
        %1816 = vmatprep.subr.mxu0 0.0
        %1817 = vmatpush1.msra.mxu0 %v1359
        %1818 = vmatprep.subr.mxu0 0.0
        %1819 = vmatpush1.msra.mxu0 0.0
        %1820 = vmatprep.subr.mxu0 0.0
        %1821 = vmatpush1.msra.mxu0 0.0
        %1822 = vmatprep.subr.mxu0 0.0
        %1823 = vmatpush1.msra.mxu0 0.0
        %1824 = vmatprep.subr.mxu0 0.0
        %1825 = vmatpush1.msra.mxu0 0.0
        %1826 = vmatprep.subr.mxu0 0.0
        %1827 = vmatpush1.msra.mxu0 0.0
        %1828 = vmatprep.subr.mxu0 0.0
        %1829 = vmatpush1.msra.mxu0 0.0
        %1830 = vmatprep.subr.mxu0 0.0
        %1831 = vmatpush1.msra.mxu0 0.0
        %1832 = vmatprep.subr.mxu0 0.0
        %1833 = vmatpush1.msra.mxu0 0.0
        %1834 = vmatprep.subr.mxu0 0.0
        %1835 = vmatpush1.msra.mxu0 0.0
        %1836 = vmatprep.subr.mxu0 0.0
        %1837 = vmatpush1.msra.mxu0 0.0
        %1838 = vmatprep.subr.mxu0 0.0
        %1839 = vmatpush1.msra.mxu0 0.0
        %1840 = vmatprep.subr.mxu0 0.0
        %1841 = vmatpush1.msra.mxu0 0.0
        %1842 = vmatprep.subr.mxu0 0.0
        %1843 = vmatpush1.msra.mxu0 0.0
        %1844 = vmatprep.subr.mxu0 0.0
        %1845 = vmatpush1.msra.mxu0 0.0
        %1846 = vmatprep.subr.mxu0 0.0
        %1847 = vmatpush1.msra.mxu0 0.0
        %1848 = vmatprep.subr.mxu0 0.0
        %1849 = vmatpush1.msra.mxu0 0.0
        %1850 = vmatprep.subr.mxu0 0.0
        %1851 = vmatpush1.msra.mxu0 0.0
        %1852 = vmatprep.subr.mxu0 0.0
        %1853 = vmatpush1.msra.mxu0 0.0
        %1854 = vmatprep.subr.mxu0 0.0
        %1855 = vmatpush1.msra.mxu0 0.0
        %1856 = vmatprep.subr.mxu0 0.0
        %1857 = vmatpush1.msra.mxu0 0.0
        %1858 = vmatprep.subr.mxu0 0.0
        %1859 = vmatpush1.msra.mxu0 0.0
        %1860 = vmatprep.subr.mxu0 0.0
        %1861 = vmatpush1.msra.mxu0 0.0
        %1862 = vmatprep.subr.mxu0 0.0
        %1863 = vmatpush1.msra.mxu0 0.0
        %1864 = vmatprep.subr.mxu0 0.0
        %1865 = vmatpush1.msra.mxu0 0.0
        %1866 = vmatprep.subr.mxu0 0.0
        %1867 = vmatpush1.msra.mxu0 0.0
        %1868 = vmatprep.subr.mxu0 0.0
        %1869 = vmatpush1.msra.mxu0 0.0
        %1870 = vmatprep.subr.mxu0 0.0
        %1871 = vmatpush1.msra.mxu0 0.0
        %1872 = vmatprep.subr.mxu0 0.0
        %1873 = vmatpush1.msra.mxu0 0.0
        %1874 = vmatprep.subr.mxu0 0.0
        %1875 = vmatpush1.msra.mxu0 0.0
        %1876 = vmatprep.subr.mxu0 0.0
        %1877 = vmatpush1.msra.mxu0 0.0
        %1878 = vmatprep.mubr.f32.mxu0 0.0
        %1879 = vmatmul.mubr.f32.gmra.mrb[0].mxu0 %v933
        %v1880 = vpop.f32.mrb[0].mxu0
        %v1881 = vadd.f32 0.0, %v1880
        %v1882 = vpop.f32.mrb[0].mxu0
        %1883 = vmatprep.mubr.f32.mxu0 0.0
        %1884 = vmatmul.mubr.f32.gmra.mrb[0].mxu0 %v936
        %v1885 = vpop.f32.mrb[0].mxu0
        %v1886 = vadd.f32 0.0, %v1885
        %v1887 = vpop.f32.mrb[0].mxu0
        %1888 = vdwg.mxu0
        %s1889 = scalar_lea.vmem [#allocation10], 160
        %v1890 = vld [vmem:[%s1889] sm:$0xff]
        %v1891 = vld [vmem:[%s1889 + $0x8] sm:$0xff]
        %v1892 = vld [vmem:[%s1889 + $0x10] sm:$0xff]
        %v1893 = vld [vmem:[%s1889 + $0x18] sm:$0xff]
        %v1894 = vld [vmem:[%s1889 + $0x20] sm:$0xff]
        %v1895 = vld [vmem:[%s1889 + $0x28] sm:$0xff]
        %v1896 = vld [vmem:[%s1889 + $0x30] sm:$0xff]
        %v1897 = vld [vmem:[%s1889 + $0x38] sm:$0xff]
        %v1898 = vld [vmem:[%s1889 + $0x40] sm:$0xf]
        %v1899 = vld [vmem:[%s1889 + $0x48] sm:$0xf]
        %v1901 = vsel %vm590, %v1898, 0
        %v1904 = vsel %vm590, %v1899, 0
        %1906 = vmatprep.subr.mxu0 %v1891
        %1907 = vmatpush1.msra.mxu0 %v1890
        %1908 = vmatprep.subr.mxu0 %v1893
        %1909 = vmatpush1.msra.mxu0 %v1892
        %1910 = vmatprep.subr.mxu0 %v1895
        %1911 = vmatpush1.msra.mxu0 %v1894
        %1912 = vmatprep.subr.mxu0 %v1897
        %1913 = vmatpush1.msra.mxu0 %v1896
        %1914 = vmatprep.subr.mxu0 %v1904
        %1915 = vmatpush1.msra.mxu0 %v1901
        %1916 = vmatprep.subr.mxu0 0.0
        %1917 = vmatpush1.msra.mxu0 0.0
        %1918 = vmatprep.subr.mxu0 0.0
        %1919 = vmatpush1.msra.mxu0 0.0
        %1920 = vmatprep.subr.mxu0 0.0
        %1921 = vmatpush1.msra.mxu0 0.0
        %1922 = vmatprep.subr.mxu0 0.0
        %1923 = vmatpush1.msra.mxu0 0.0
        %1924 = vmatprep.subr.mxu0 0.0
        %1925 = vmatpush1.msra.mxu0 0.0
        %1926 = vmatprep.subr.mxu0 0.0
        %1927 = vmatpush1.msra.mxu0 0.0
        %1928 = vmatprep.subr.mxu0 0.0
        %1929 = vmatpush1.msra.mxu0 0.0
        %1930 = vmatprep.subr.mxu0 0.0
        %1931 = vmatpush1.msra.mxu0 0.0
        %1932 = vmatprep.subr.mxu0 0.0
        %1933 = vmatpush1.msra.mxu0 0.0
        %1934 = vmatprep.subr.mxu0 0.0
        %1935 = vmatpush1.msra.mxu0 0.0
        %1936 = vmatprep.subr.mxu0 0.0
        %1937 = vmatpush1.msra.mxu0 0.0
        %1938 = vmatprep.subr.mxu0 0.0
        %1939 = vmatpush1.msra.mxu0 0.0
        %1940 = vmatprep.subr.mxu0 0.0
        %1941 = vmatpush1.msra.mxu0 0.0
        %1942 = vmatprep.subr.mxu0 0.0
        %1943 = vmatpush1.msra.mxu0 0.0
        %1944 = vmatprep.subr.mxu0 0.0
        %1945 = vmatpush1.msra.mxu0 0.0
        %1946 = vmatprep.subr.mxu0 0.0
        %1947 = vmatpush1.msra.mxu0 0.0
        %1948 = vmatprep.subr.mxu0 0.0
        %1949 = vmatpush1.msra.mxu0 0.0
        %1950 = vmatprep.subr.mxu0 0.0
        %1951 = vmatpush1.msra.mxu0 0.0
        %1952 = vmatprep.subr.mxu0 0.0
        %1953 = vmatpush1.msra.mxu0 0.0
        %1954 = vmatprep.subr.mxu0 0.0
        %1955 = vmatpush1.msra.mxu0 0.0
        %1956 = vmatprep.subr.mxu0 0.0
        %1957 = vmatpush1.msra.mxu0 0.0
        %1958 = vmatprep.subr.mxu0 0.0
        %1959 = vmatpush1.msra.mxu0 0.0
        %1960 = vmatprep.subr.mxu0 0.0
        %1961 = vmatpush1.msra.mxu0 0.0
        %1962 = vmatprep.subr.mxu0 0.0
        %1963 = vmatpush1.msra.mxu0 0.0
        %1964 = vmatprep.subr.mxu0 0.0
        %1965 = vmatpush1.msra.mxu0 0.0
        %1966 = vmatprep.subr.mxu0 0.0
        %1967 = vmatpush1.msra.mxu0 0.0
        %1968 = vmatprep.subr.mxu0 0.0
        %1969 = vmatpush1.msra.mxu0 0.0
        %1970 = vmatprep.mubr.f32.mxu0 0.0
        %1971 = vmatmul.mubr.f32.gmra.mrb[0].mxu0 %v1035
        %v1972 = vpop.f32.mrb[0].mxu0
        %v1973 = vadd.f32 0.0, %v1972
        %v1974 = vpop.f32.mrb[0].mxu0
        %v1975 = vadd.f32 0.0, %v1974
        %1976 = vmatprep.mubr.f32.mxu0 0.0
        %1977 = vmatmul.mubr.f32.gmra.mrb[0].mxu0 %v1038
        %v1978 = vpop.f32.mrb[0].mxu0
        %v1979 = vadd.f32 0.0, %v1978
        %v1980 = vpop.f32.mrb[0].mxu0
        %v1981 = vadd.f32 0.0, %v1980
        %1982 = vdwg.mxu0
        %v1983 = vadd.f32 %v1810, %v1973
        %v1984 = vadd.f32 %v1811, %v1975
        %v1985 = vadd.f32 %v1812, %v1979
        %v1986 = vadd.f32 %v1813, %v1981
        %s1987 = scalar_lea.vmem [#allocation11], 128
        %v1988 = vld [vmem:[%s1987] sm:$0xff]
        %v1989 = vld [vmem:[%s1987 + $0x8] sm:$0xff]
        %v1990 = vld [vmem:[%s1987 + $0x10] sm:$0xff]
        %v1991 = vld [vmem:[%s1987 + $0x18] sm:$0xff]
        %v1992 = vld [vmem:[%s1987 + $0x20] sm:$0xff]
        %v1993 = vld [vmem:[%s1987 + $0x28] sm:$0xff]
        %v1994 = vld [vmem:[%s1987 + $0x30] sm:$0xff]
        %v1995 = vld [vmem:[%s1987 + $0x38] sm:$0xff]
        %v1997 = vsel %vm1378, %v1881, 0
        %v2000 = vsel %vm1378, %v1886, 0
        %2002 = vmatprep.subr.mxu0 %v1989
        %2003 = vmatpush1.msra.mxu0 %v1988
        %2004 = vmatprep.subr.mxu0 %v1991
        %2005 = vmatpush1.msra.mxu0 %v1990
        %2006 = vmatprep.subr.mxu0 %v1993
        %2007 = vmatpush1.msra.mxu0 %v1992
        %2008 = vmatprep.subr.mxu0 %v1995
        %2009 = vmatpush1.msra.mxu0 %v1994
        %2010 = vmatprep.subr.mxu0 0.0
        %2011 = vmatpush1.msra.mxu0 0.0
        %2012 = vmatprep.subr.mxu0 0.0
        %2013 = vmatpush1.msra.mxu0 0.0
        %2014 = vmatprep.subr.mxu0 0.0
        %2015 = vmatpush1.msra.mxu0 0.0
        %2016 = vmatprep.subr.mxu0 0.0
        %2017 = vmatpush1.msra.mxu0 0.0
        %2018 = vmatprep.subr.mxu0 0.0
        %2019 = vmatpush1.msra.mxu0 0.0
        %2020 = vmatprep.subr.mxu0 0.0
        %2021 = vmatpush1.msra.mxu0 0.0
        %2022 = vmatprep.subr.mxu0 0.0
        %2023 = vmatpush1.msra.mxu0 0.0
        %2024 = vmatprep.subr.mxu0 0.0
        %2025 = vmatpush1.msra.mxu0 0.0
        %2026 = vmatprep.subr.mxu0 0.0
        %2027 = vmatpush1.msra.mxu0 0.0
        %2028 = vmatprep.subr.mxu0 0.0
        %2029 = vmatpush1.msra.mxu0 0.0
        %2030 = vmatprep.subr.mxu0 0.0
        %2031 = vmatpush1.msra.mxu0 0.0
        %2032 = vmatprep.subr.mxu0 0.0
        %2033 = vmatpush1.msra.mxu0 0.0
        %2034 = vmatprep.subr.mxu0 0.0
        %2035 = vmatpush1.msra.mxu0 0.0
        %2036 = vmatprep.subr.mxu0 0.0
        %2037 = vmatpush1.msra.mxu0 0.0
        %2038 = vmatprep.subr.mxu0 0.0
        %2039 = vmatpush1.msra.mxu0 0.0
        %2040 = vmatprep.subr.mxu0 0.0
        %2041 = vmatpush1.msra.mxu0 0.0
        %2042 = vmatprep.subr.mxu0 0.0
        %2043 = vmatpush1.msra.mxu0 0.0
        %2044 = vmatprep.subr.mxu0 0.0
        %2045 = vmatpush1.msra.mxu0 0.0
        %2046 = vmatprep.subr.mxu0 0.0
        %2047 = vmatpush1.msra.mxu0 0.0
        %2048 = vmatprep.subr.mxu0 0.0
        %2049 = vmatpush1.msra.mxu0 0.0
        %2050 = vmatprep.subr.mxu0 0.0
        %2051 = vmatpush1.msra.mxu0 0.0
        %2052 = vmatprep.subr.mxu0 0.0
        %2053 = vmatpush1.msra.mxu0 0.0
        %2054 = vmatprep.subr.mxu0 0.0
        %2055 = vmatpush1.msra.mxu0 0.0
        %2056 = vmatprep.subr.mxu0 0.0
        %2057 = vmatpush1.msra.mxu0 0.0
        %2058 = vmatprep.subr.mxu0 0.0
        %2059 = vmatpush1.msra.mxu0 0.0
        %2060 = vmatprep.subr.mxu0 0.0
        %2061 = vmatpush1.msra.mxu0 0.0
        %2062 = vmatprep.subr.mxu0 0.0
        %2063 = vmatpush1.msra.mxu0 0.0
        %2064 = vmatprep.subr.mxu0 0.0
        %2065 = vmatpush1.msra.mxu0 0.0
        %2066 = vmatprep.mubr.f32.mxu0 0.0
        %2067 = vmatmul.mubr.f32.gmra.mrb[0].mxu0 %v1997
        %v2068 = vpop.f32.mrb[0].mxu0
        %v2069 = vadd.f32 0.0, %v2068
        %v2070 = vpop.f32.mrb[0].mxu0
        %v2071 = vadd.f32 0.0, %v2070
        %2072 = vmatprep.mubr.f32.mxu0 0.0
        %2073 = vmatmul.mubr.f32.gmra.mrb[0].mxu0 %v2000
        %v2074 = vpop.f32.mrb[0].mxu0
        %v2075 = vadd.f32 0.0, %v2074
        %v2076 = vpop.f32.mrb[0].mxu0
        %v2077 = vadd.f32 0.0, %v2076
        %2078 = vdwg.mxu0
        %v2079 = vadd.f32 %v1983, %v2069
        %v2080 = vadd.f32 %v1984, %v2071
        %v2081 = vadd.f32 %v1985, %v2075
        %v2082 = vadd.f32 %v1986, %v2077
        %v2083 = vld [vmem:[%s8] sm:$0xff]
        %v2084 = vld [vmem:[%s8 + $0x8] sm:$0xff]
        %v2085 = vmul.f32 %v2079, %v1219
        %v2086 = vmul.f32 %v2081, %v1224
        %v2087 = vadd.f32 %v2083, %v2085
        %v2088 = vadd.f32 %v2084, %v2086
        %v2089 = vmul.f32 %v2079, %v1232
        %v2090 = vmul.f32 %v2081, %v1236
        %2093 = vrot.lane.b32.xlu0 %v2089, 96
        %v2094 = vpop.permute.xlu0 %2093
        %2095 = vrot.lane.b32.xlu0 %v2090, 96
        %v2096 = vpop.permute.xlu0 %2095
        %v2099 = vadd.f32 %v2087, %v2094
        %v2100 = vadd.f32 %v2088, %v2096
        %v2101 = vmul.f32 %v2079, %v1252
        %v2102 = vmul.f32 %v2081, %v1256
        %2105 = vrot.lane.b32.xlu0 %v2101, 64
        %v2106 = vpop.permute.xlu0 %2105
        %2107 = vrot.lane.b32.xlu0 %v2102, 64
        %v2108 = vpop.permute.xlu0 %2107
        %v2111 = vadd.f32 %v2099, %v2106
        %v2112 = vadd.f32 %v2100, %v2108
        %v2113 = vmul.f32 %v2079, %v1264
        %v2114 = vmul.f32 %v2081, %v1268
        %2117 = vrot.lane.b32.xlu0 %v2113, 32
        %v2118 = vpop.permute.xlu0 %2117
        %2119 = vrot.lane.b32.xlu0 %v2114, 32
        %v2120 = vpop.permute.xlu0 %2119
        %v2123 = vadd.f32 %v2111, %v2118
        %v2124 = vadd.f32 %v2112, %v2120
        %v2125 = vmul.f32 %v2080, %v1284
        %v2126 = vmul.f32 %v2082, %v1288
        %v2127 = vadd.f32 %v2123, %v2125
        %v2128 = vadd.f32 %v2124, %v2126
        %v2129 = vmul.f32 %v2080, %v1296
        %v2130 = vmul.f32 %v2082, %v1300
        %2133 = vrot.lane.b32.xlu0 %v2129, 96
        %v2134 = vpop.permute.xlu0 %2133
        %2135 = vrot.lane.b32.xlu0 %v2130, 96
        %v2136 = vpop.permute.xlu0 %2135
        %v2139 = vadd.f32 %v2127, %v2134
        %v2140 = vadd.f32 %v2128, %v2136
        %v2141 = vmul.f32 %v2080, %v1316
        %v2142 = vmul.f32 %v2082, %v1320
        %2145 = vrot.lane.b32.xlu0 %v2141, 64
        %v2146 = vpop.permute.xlu0 %2145
        %2147 = vrot.lane.b32.xlu0 %v2142, 64
        %v2148 = vpop.permute.xlu0 %2147
        %v2151 = vadd.f32 %v2139, %v2146
        %v2152 = vadd.f32 %v2140, %v2148
        %v2153 = vmul.f32 %v2080, %v1328
        %v2154 = vmul.f32 %v2082, %v1332
        %2157 = vrot.lane.b32.xlu0 %v2153, 32
        %v2158 = vpop.permute.xlu0 %2157
        %2159 = vrot.lane.b32.xlu0 %v2154, 32
        %v2160 = vpop.permute.xlu0 %2159
        %v2163 = vadd.f32 %v2151, %v2158
        %v2164 = vadd.f32 %v2152, %v2160
        %v2165 = vtanh.pop %v2163
        %v2166 = vtanh.pop %v2164
        %2169 = vrot.lane.b32.xlu0 %v454, 32
        %v2170 = vpop.permute.xlu0 %2169
        %2171 = vrot.lane.b32.xlu0 %v455, 32
        %v2172 = vpop.permute.xlu0 %2171
        %v2175 = vmul.f32 %v1355, %v2170
        %v2176 = vmul.f32 %v1357, %v2172
        %v2177 = vsub.f32 1.0, %v1355
        %v2178 = vsub.f32 1.0, %v1357
        %2181 = vrot.lane.b32.xlu0 %v2165, 32
        %v2182 = vpop.permute.xlu0 %2181
        %2183 = vrot.lane.b32.xlu0 %v2166, 32
        %v2184 = vpop.permute.xlu0 %2183
        %v2187 = vmul.f32 %v2177, %v2182
        %v2188 = vmul.f32 %v2178, %v2184
        %v2189 = vadd.f32 %v2175, %v2187
        %v2190 = vadd.f32 %v2176, %v2188
        %2193 = vrot.lane.b32.xlu0 %v2189, 96
        %v2194 = vpop.permute.xlu0 %2193
        %2195 = vrot.lane.b32.xlu0 %v2190, 96
        %v2196 = vpop.permute.xlu0 %2195
        %2199 = vst.msk [vmem:[%s448] sm:$0xff] %vm1378, %v2194
        %2200 = vst.msk [vmem:[%s448 + $0x8] sm:$0xff] %vm1378, %v2196
        %s2201 = sand.u32 %s238, 1
        %s2202 = scalar_lea.sflag [#allocation4], %s2201
        %s2203 = sand.u32 %s238, 1
        %s2204 = smul.addr %s2203, 16
        %s2205 = scalar_lea.vmem [#allocation13], %s2204
        // Predicated region
        $region81: #{tpu_custom_call.1} parent=55 // pred_check
          %p2206 = pneg %p248
        $region82: #{tpu_custom_call.1} parent=55 // pred_check_branch
          %2208 = sbr.rel (%p2206) target = $region84
        $region83: #{tpu_custom_call.1} parent=55 // pred_region
          %s2209 = smul.u32 2, %s31
          %s2211 = ssub.s32 256, 256
          %2212 = vsyncadd %s2202, %s2211
          %s2213 = smul.addr %s2209, 128
          %s2214 = scalar_lea.hbm %s9, %s2213
          %s2215 = sshll.u32 %s2205, 4
          %s2216 = int_to_ptr.vmem [resolvable:$true] %s2215
          %2221 = dma.vmem_to_hbm [thread:$0]  %s2216, 256, %s2214, %s2202, 128, 128, 8
        $region84: #{tpu_custom_call.1} parent=55 // pred_fallthru
          _
      $region56: #{tpu_custom_call.1} parent=5 // pred_fallthru
        _
      %p2222 = scmp.le.s32.totalorder 2, %s26
      // Predicated region
      $region85: #{tpu_custom_call.1} parent=5 // pred_check
        %p2223 = pneg %p2222
      $region86: #{tpu_custom_call.1} parent=5 // pred_check_branch
        %2225 = sbr.rel (%p2223) target = $region88
      $region87: #{tpu_custom_call.1} parent=5 // pred_region
        %s2226 = ssub.s32 %s26, 2
        // Predicated region
        $region89: #{tpu_custom_call.1} parent=87 // pred_check
          %p2227 = pneg %p254
        $region90: #{tpu_custom_call.1} parent=87 // pred_check_branch
          %2229 = sbr.rel (%p2227) target = $region92
        $region91: #{tpu_custom_call.1} parent=87 // pred_region
          %s2230 = sand.u32 %s239, 1
          %s2231 = scalar_lea.sflag [#allocation4], %s2230
          %s2232 = sand.u32 %s239, 1
          %s2233 = smul.addr %s2232, 16
          %s2234 = scalar_lea.vmem [#allocation13], %s2233
          %2235 = dma.done %s2231, 256
        $region92: #{tpu_custom_call.1} parent=87 // pred_fallthru
          _
      $region88: #{tpu_custom_call.1} parent=5 // pred_fallthru
        _
    $region6: #{tpu_custom_call.1} parent=1 // loop_footer
      %s30 = sadd.s32 1, %s26
    $region7: #{tpu_custom_call.1} parent=1 // loop_footer_branch
      %25 = sbr.rel target = $region3
    $region8: #{tpu_custom_call.1} parent=1 // loop_exit
      _
    %2236 = vsyncpa [#allocation3], 1
    %s2237 = scalar_lea.sflag [#allocation3], 1
    %2238 = vsyncpa %s2237, 1
    %2239 = vsyncpa [#allocation6], 1
    %s2240 = scalar_lea.sflag [#allocation6], 1
    %2241 = vsyncpa %s2240, 1
    %2242 = vsyncpa [#allocation9], 1
    %2243 = vsyncpa [#allocation12], 1
    %2244 = vsyncpa [#allocation4], 1
    %s2245 = scalar_lea.sflag [#allocation4], 1
    %2246 = vsyncpa %s2245, 1

</llo_original>
